<compile_context>
chip_gen: v7x
topology: tpu7x:2x2x1
jax: 0.10.0
libtpu: 0.0.40
codegen_flags: <defaults>
</compile_context>

<pallas_src>
import jax
import jax.numpy as jnp
from jax.experimental import pallas as pl
from jax.experimental.pallas import tpu as pltpu

# Hyperparameters from GateCNN.__init__ / forward
VOCAB = 5000
EMB = 32            # embedding_dim
N_CLASS = 2
K = 10              # conv kernel size
S = 4               # conv stride
C1 = 32             # conv_A_1 / conv_B_1 out channels (== in channels -> layer-2 reuse is legal)
H_LIN = 128         # logist1 hidden width
NJ = -(-K // S)     # ceil(K/S) = 3 tap groups of S taps (last group zero-padded)
DW = S + NJ - 1     # folded-x rows needed per wide row (= 6)
WIDE = DW * S * EMB       # 768 lanes per wide layer-1 input row
GOUT = S * 2 * C1         # 256 lanes of layer-1 output per wide row (S positions x (A|B))

assert EMB == C1    # required for the conv_A_1/conv_B_1 reuse in layer 2


def conv_out_len(L):
    return (L - K) // S + 1


# --------------------------------------------------------------------------- #
# Kernel: TB sequences per grid step, one wide matmul (layer 1) + 3 shifted
# 128-deep matmuls (layer 2), dense (TB*P2, 32) activation output.
# --------------------------------------------------------------------------- #
def gatecnn_kernel(xw_ref, w1_ref, wp_ref, bconv_ref, h2_ref):
    """
    xw_ref   : (RW, WIDE) bf16   RW = TB*P2 wide rows; row (t, p) holds the
                                 embedded tokens feeding conv-1 output positions
                                 p*S .. p*S+S-1 of sequence t (lane-dense).
    w1_ref   : (WIDE, GOUT) bf16 layer-1 weight producing, per wide row, the
                                 (A|B) pre-activations of those S positions.
    wp_ref   : (NJ, S*C1, 2*C1) bf16  layer-2 tap-group weights (cols [0:C1]=A,
                                 [C1:2C1]=B, rows for taps >= K are zero).
    bconv_ref: (1, 2*C1) f32     concat(bias_A, bias_B)
    h2_ref   : (RW, C1) f32      gated conv-2 activations per folded position
                                 (garbage rows p >= L2 are masked in the wrapper).
    """
    RW = xw_ref.shape[0]
    RV = RW - (NJ - 1)

    bconv = bconv_ref[...]                                     # (1, 64) f32

    # ---- layer 1: one 768-deep MXU matmul over TB*P2 rows
    acc1 = jnp.dot(xw_ref[...], w1_ref[...],
                   preferred_element_type=jnp.float32)         # (RW, 256)

    # gate each position's (A|B) 64-lane block in f32 (v5e-safe), cast to bf16
    # only for the next MXU matmul; lane-concat yields the folded layer-2 input.
    gated = []
    for r in range(S):
        blk = acc1[:, r * 2 * C1:(r + 1) * 2 * C1] + bconv     # (RW, 64)
        gated.append((blk[:, :C1] * jax.nn.sigmoid(blk[:, C1:])).astype(jnp.bfloat16))
    h1f = jnp.concatenate(gated, axis=-1)                      # (RW, 128) bf16

    # ---- layer 2 (conv_A_1/conv_B_1 reused, exactly as the PyTorch forward):
    # three shifted 128-deep matmuls; the global row shift is valid because each
    # sequence owns a contiguous, fixed-period block of P2 rows and
    # L2 + NJ - 1 <= P2 (asserted in the wrapper), so valid rows never mix
    # sequences and invalid/garbage rows only ever meet zero weight rows.
    wp = wp_ref[...]
    acc2 = jnp.dot(h1f[0:RV], wp[0], preferred_element_type=jnp.float32)
    for j in range(1, NJ):
        acc2 = acc2 + jnp.dot(h1f[j:j + RV], wp[j], preferred_element_type=jnp.float32)
    acc2 = acc2 + bconv                                        # (RV, 64)
    h2 = acc2[:, :C1] * jax.nn.sigmoid(acc2[:, C1:])           # (RV, 32) f32

    # pad back to RW rows (the padded rows fall on per-sequence garbage
    # positions p >= L2, which the wrapper slices away before pooling).
    h2_ref[...] = jnp.concatenate(
        [h2, jnp.zeros((NJ - 1, C1), jnp.float32)], axis=0)


# --------------------------------------------------------------------------- #
# Parameter glue (wrapper side)
# --------------------------------------------------------------------------- #
def init_params(key):
    """Deterministic synthetic params, PyTorch layouts (Conv1d (Cout,Cin,K), Linear (out,in))."""
    ks = jax.random.split(key, 9)
    return dict(
        emb=jax.random.normal(ks[0], (VOCAB, EMB), jnp.float32) * 0.1,
        wA=jax.random.normal(ks[1], (C1, EMB, K), jnp.float32) * 0.05,
        bA=jax.random.normal(ks[2], (C1,), jnp.float32) * 0.05,
        wB=jax.random.normal(ks[3], (C1, EMB, K), jnp.float32) * 0.05,
        bB=jax.random.normal(ks[4], (C1,), jnp.float32) * 0.05,
        w1=jax.random.normal(ks[5], (H_LIN, C1), jnp.float32) * 0.05,
        b1=jax.random.normal(ks[6], (H_LIN,), jnp.float32) * 0.05,
        w2=jax.random.normal(ks[7], (N_CLASS, H_LIN), jnp.float32) * 0.05,
        b2=jax.random.normal(ks[8], (N_CLASS,), jnp.float32) * 0.05,
    )


def pack_params(p):
    """Pack conv A/B weights (wide layer-1 weight + per-tap-group layer-2 weight)
    and fuse logist1 @ logist2 (valid: no nonlinearity between them in the module)."""
    wA = jnp.transpose(p['wA'], (2, 1, 0))                 # (K, Cin, Cout)
    wB = jnp.transpose(p['wB'], (2, 1, 0))
    wab = jnp.concatenate([wA, wB], axis=-1)               # (K, C1, 2*C1): [A | B]

    # layer-2 tap-group weights
    wp = jnp.zeros((NJ, S * C1, 2 * C1), jnp.float32)
    for j in range(NJ):
        for u in range(S):
            k = j * S + u
            if k < K:
                wp = wp.at[j, u * C1:(u + 1) * C1, :].set(wab[k])

    # wide layer-1 weight: rows indexed by (d, u) = tap inside the 6-folded-row
    # window, cols by (r, A|B) = output-position offset within the wide row.
    w1_wide = jnp.zeros((WIDE, GOUT), jnp.float32)
    for d in range(DW):
        for u in range(S):
            for r in range(S):
                j = d - r
                if 0 <= j < NJ:
                    k = j * S + u
                    if k < K:
                        row0 = d * S * EMB + u * EMB
                        col0 = r * 2 * C1
                        w1_wide = w1_wide.at[row0:row0 + EMB, col0:col0 + 2 * C1].set(wab[k])

    bconv = jnp.concatenate([p['bA'], p['bB']]).reshape(1, 2 * C1)
    w_fused = p['w1'].T @ p['w2'].T                        # (C1, N_CLASS)
    b_fused = p['b1'].reshape(1, H_LIN) @ p['w2'].T + p['b2'].reshape(1, N_CLASS)
    return (w1_wide.astype(jnp.bfloat16), wp.astype(jnp.bfloat16),
            bconv, w_fused, b_fused)


def build_wide_input(x_emb):
    """(B, L, EMB) bf16 -> (B*P2, WIDE) bf16; wide row (t, p) = folded-x rows
    [S*p, S*p + DW) of sequence t, zero-padded past the sequence end."""
    B, L, _ = x_emb.shape
    LF = L // S
    P2 = LF // S
    xf = x_emb.reshape(B, LF, S * EMB)                     # lane-dense folded tokens
    xf = jnp.concatenate(
        [xf, jnp.zeros((B, NJ - 1, S * EMB), x_emb.dtype)], axis=1)
    cols = [xf[:, d::S, :][:, :P2, :] for d in range(DW)]  # each (B, P2, 128)
    xw = jnp.concatenate(cols, axis=-1)                    # (B, P2, WIDE)
    return xw.reshape(B * P2, WIDE)


def _pick_tb(B, P2):
    """Sequences per grid step, sized against the scoped-VMEM budget (not physical
    VMEM), with >=2 grid steps so v7x can shard the batch over both TensorCores."""
    per_seq = P2 * WIDE * 2                                # bf16 wide-input bytes / sequence
    tb = max(1, min(B, (8 << 20) // (2 * per_seq)))        # ~8 MiB for double-buffered input
    if B >= 2:
        tb = min(tb, B // 2)
    while B % tb:
        tb -= 1
    return tb


# --------------------------------------------------------------------------- #
# Forward
# --------------------------------------------------------------------------- #
def gatecnn_forward(tokens, params, *, tb=None):
    B, L = tokens.shape
    assert L % (S * S) == 0, "demo wrapper assumes L divisible by S*S"
    L1 = conv_out_len(L)
    assert L1 >= K, "sequence too short for the second gated-conv layer"
    L2 = conv_out_len(L1)
    LF = L // S
    P2 = LF // S
    assert LF - L1 >= NJ - 1          # padded tail rows only meet zero conv weights
    assert L2 + NJ - 1 <= P2          # layer-2 shifted slices never cross sequences

    w1_wide, wp, bconv, w_fused, b_fused = pack_params(params)

    # Embedding lookup kept as XLA glue (bf16 table halves the HBM round trip).
    # TODO(synk): fuse the gather into the kernel to remove this round trip.
    emb = params['emb'].astype(jnp.bfloat16)
    x_emb = jnp.take(emb, tokens, axis=0)                  # (B, L, EMB) bf16
    xw = build_wide_input(x_emb)                           # (B*P2, WIDE) bf16

    tb = _pick_tb(B, P2) if tb is None else tb
    assert B % tb == 0
    rw = tb * P2

    h2 = pl.pallas_call(
        gatecnn_kernel,
        out_shape=jax.ShapeDtypeStruct((B * P2, C1), jnp.float32),
        grid=(B // tb,),
        in_specs=[
            pl.BlockSpec((rw, WIDE), lambda b: (b, 0)),            # per-step wide input
            pl.BlockSpec((WIDE, GOUT), lambda b: (0, 0)),          # layer-1 wide weight
            pl.BlockSpec((NJ, S * C1, 2 * C1), lambda b: (0, 0, 0)),  # layer-2 tap-group weights
            pl.BlockSpec((1, 2 * C1), lambda b: (0, 0)),           # conv biases
        ],
        out_specs=pl.BlockSpec((rw, C1), lambda b: (b, 0)),
        compiler_params=pltpu.CompilerParams(
            dimension_semantics=("parallel",)),
    )(xw, w1_wide, wp, bconv)

    # mean over the L2 valid conv-2 positions, then the fused logist1@logist2 linear
    pooled = jnp.mean(h2.reshape(B, P2, C1)[:, :L2, :], axis=1)    # (B, C1)
    return pooled @ w_fused + b_fused


# --------------------------------------------------------------------------- #
# Pure-JAX f32 reference mirroring the PyTorch forward semantics exactly
# --------------------------------------------------------------------------- #
def reference_forward(tokens, p):
    x = jnp.take(p['emb'], tokens, axis=0)                 # (B, L, E)
    wA = jnp.transpose(p['wA'], (2, 1, 0))                 # (K, Cin, Cout)
    wB = jnp.transpose(p['wB'], (2, 1, 0))

    def gated(h):                                          # h: (B, Lin, Cin)
        Lout = conv_out_len(h.shape[1])
        a = jnp.zeros((h.shape[0], Lout, C1), jnp.float32) + p['bA']
        g = jnp.zeros((h.shape[0], Lout, C1), jnp.float32) + p['bB']
        for k in range(K):
            hk = h[:, k:k + S * (Lout - 1) + 1:S, :]
            a = a + jnp.einsum('ble,eo->blo', hk, wA[k])
            g = g + jnp.einsum('ble,eo->blo', hk, wB[k])
        return a * jax.nn.sigmoid(g)

    h = gated(gated(x))
    pool = jnp.mean(h, axis=1)                             # mean over sequence
    hid = pool @ p['w1'].T + p['b1']
    return hid @ p['w2'].T + p['b2']


if __name__ == "__main__":
    key = jax.random.PRNGKey(0)
    pkey, tkey = jax.random.split(key)
    params = init_params(pkey)

    B, L = 16, 64          # L=64 -> L1=14, L2=2; B=16 -> 2 grid steps of 8 sequences
    tokens = jax.random.randint(tkey, (B, L), 0, VOCAB, dtype=jnp.int32)

    out = jax.block_until_ready(gatecnn_forward(tokens, params))
    assert out.shape == (B, N_CLASS)

    ref = reference_forward(tokens, params)
    assert bool(jnp.allclose(out, ref, rtol=3e-2, atol=3e-3)), (out, ref)

    print("KERNEL_OK")
</pallas_src>

<mosaic_0001>
module attributes {stable_mosaic.version = 11 : i64} {
  func.func @gatecnn_kernel(%arg0: i32, %arg1: memref<32x768xbf16, #tpu.memory_space<vmem>>, %arg2: memref<768x256xbf16, #tpu.memory_space<vmem>>, %arg3: memref<3x128x64xbf16, #tpu.memory_space<vmem>>, %arg4: memref<1x64xf32, #tpu.memory_space<vmem>>, %arg5: memref<32x32xf32, #tpu.memory_space<vmem>>) attributes {dimension_semantics = [#tpu.dimension_semantics<parallel>], iteration_bounds = array<i64: 2>, scalar_prefetch = 0 : i64, scratch_operands = 0 : i64, tpu.core_type = #tpu.core_type<tc>, window_params = [{transform_indices = @transform_0, window_bounds = array<i64: 32, 768>}, {pipeline_mode = #tpu.pipeline_mode<synchronous>, transform_indices = @transform_1, window_bounds = array<i64: 768, 256>}, {pipeline_mode = #tpu.pipeline_mode<synchronous>, transform_indices = @transform_2, window_bounds = array<i64: 3, 128, 64>}, {pipeline_mode = #tpu.pipeline_mode<synchronous>, transform_indices = @transform_3, window_bounds = array<i64: 1, 64>}, {transform_indices = @transform_4, window_bounds = array<i64: 32, 32>}]} {
    %c0 = arith.constant 0 : index
    %c0_0 = arith.constant 0 : index
    %0 = vector.load %arg4[%c0, %c0_0] : memref<1x64xf32, #tpu.memory_space<vmem>>, vector<1x64xf32>
    %c0_1 = arith.constant 0 : index
    %c0_2 = arith.constant 0 : index
    %1 = vector.load %arg1[%c0_1, %c0_2] : memref<32x768xbf16, #tpu.memory_space<vmem>>, vector<32x768xbf16>
    %c0_3 = arith.constant 0 : index
    %c0_4 = arith.constant 0 : index
    %2 = vector.load %arg2[%c0_3, %c0_4] : memref<768x256xbf16, #tpu.memory_space<vmem>>, vector<768x256xbf16>
    %cst = arith.constant dense<0.000000e+00> : vector<32x256xf32>
    %3 = tpu.matmul %1, %2, %cst {dimension_numbers = #tpu.dot_dimension_numbers<[1], [0], [0], [1], [0, 0, 1, 1], [], []>} : vector<32x768xbf16>, vector<768x256xbf16>, vector<32x256xf32> -> vector<32x256xf32>
    %4 = vector.extract_strided_slice %3 {offsets = [0, 0], sizes = [32, 64], strides = [1, 1]} : vector<32x256xf32> to vector<32x64xf32>
    %5 = vector.broadcast %0 : vector<1x64xf32> to vector<32x64xf32>
    %6 = arith.addf %4, %5 : vector<32x64xf32>
    %7 = vector.extract_strided_slice %6 {offsets = [0, 0], sizes = [32, 32], strides = [1, 1]} : vector<32x64xf32> to vector<32x32xf32>
    %8 = vector.extract_strided_slice %6 {offsets = [0, 32], sizes = [32, 32], strides = [1, 1]} : vector<32x64xf32> to vector<32x32xf32>
    %9 = arith.negf %8 : vector<32x32xf32>
    %10 = math.exp %9 : vector<32x32xf32>
    %cst_5 = arith.constant 1.000000e+00 : f32
    %11 = vector.broadcast %cst_5 : f32 to vector<32x32xf32>
    %12 = arith.addf %11, %10 : vector<32x32xf32>
    %13 = arith.divf %11, %12 : vector<32x32xf32>
    %14 = arith.mulf %7, %13 : vector<32x32xf32>
    %15 = arith.truncf %14 : vector<32x32xf32> to vector<32x32xbf16>
    %16 = vector.extract_strided_slice %3 {offsets = [0, 64], sizes = [32, 64], strides = [1, 1]} : vector<32x256xf32> to vector<32x64xf32>
    %17 = vector.broadcast %0 : vector<1x64xf32> to vector<32x64xf32>
    %18 = arith.addf %16, %17 : vector<32x64xf32>
    %19 = vector.extract_strided_slice %18 {offsets = [0, 0], sizes = [32, 32], strides = [1, 1]} : vector<32x64xf32> to vector<32x32xf32>
    %20 = vector.extract_strided_slice %18 {offsets = [0, 32], sizes = [32, 32], strides = [1, 1]} : vector<32x64xf32> to vector<32x32xf32>
    %21 = arith.negf %20 : vector<32x32xf32>
    %22 = math.exp %21 : vector<32x32xf32>
    %cst_6 = arith.constant 1.000000e+00 : f32
    %23 = vector.broadcast %cst_6 : f32 to vector<32x32xf32>
    %24 = arith.addf %23, %22 : vector<32x32xf32>
    %25 = arith.divf %23, %24 : vector<32x32xf32>
    %26 = arith.mulf %19, %25 : vector<32x32xf32>
    %27 = arith.truncf %26 : vector<32x32xf32> to vector<32x32xbf16>
    %28 = vector.extract_strided_slice %3 {offsets = [0, 128], sizes = [32, 64], strides = [1, 1]} : vector<32x256xf32> to vector<32x64xf32>
    %29 = vector.broadcast %0 : vector<1x64xf32> to vector<32x64xf32>
    %30 = arith.addf %28, %29 : vector<32x64xf32>
    %31 = vector.extract_strided_slice %30 {offsets = [0, 0], sizes = [32, 32], strides = [1, 1]} : vector<32x64xf32> to vector<32x32xf32>
    %32 = vector.extract_strided_slice %30 {offsets = [0, 32], sizes = [32, 32], strides = [1, 1]} : vector<32x64xf32> to vector<32x32xf32>
    %33 = arith.negf %32 : vector<32x32xf32>
    %34 = math.exp %33 : vector<32x32xf32>
    %cst_7 = arith.constant 1.000000e+00 : f32
    %35 = vector.broadcast %cst_7 : f32 to vector<32x32xf32>
    %36 = arith.addf %35, %34 : vector<32x32xf32>
    %37 = arith.divf %35, %36 : vector<32x32xf32>
    %38 = arith.mulf %31, %37 : vector<32x32xf32>
    %39 = arith.truncf %38 : vector<32x32xf32> to vector<32x32xbf16>
    %40 = vector.extract_strided_slice %3 {offsets = [0, 192], sizes = [32, 64], strides = [1, 1]} : vector<32x256xf32> to vector<32x64xf32>
    %41 = vector.broadcast %0 : vector<1x64xf32> to vector<32x64xf32>
    %42 = arith.addf %40, %41 : vector<32x64xf32>
    %43 = vector.extract_strided_slice %42 {offsets = [0, 0], sizes = [32, 32], strides = [1, 1]} : vector<32x64xf32> to vector<32x32xf32>
    %44 = vector.extract_strided_slice %42 {offsets = [0, 32], sizes = [32, 32], strides = [1, 1]} : vector<32x64xf32> to vector<32x32xf32>
    %45 = arith.negf %44 : vector<32x32xf32>
    %46 = math.exp %45 : vector<32x32xf32>
    %cst_8 = arith.constant 1.000000e+00 : f32
    %47 = vector.broadcast %cst_8 : f32 to vector<32x32xf32>
    %48 = arith.addf %47, %46 : vector<32x32xf32>
    %49 = arith.divf %47, %48 : vector<32x32xf32>
    %50 = arith.mulf %43, %49 : vector<32x32xf32>
    %51 = arith.truncf %50 : vector<32x32xf32> to vector<32x32xbf16>
    %52 = tpu.concatenate %15, %27, %39, %51 in 1 : vector<32x32xbf16>, vector<32x32xbf16>, vector<32x32xbf16>, vector<32x32xbf16> -> vector<32x128xbf16>
    %c0_9 = arith.constant 0 : index
    %c0_10 = arith.constant 0 : index
    %c0_11 = arith.constant 0 : index
    %53 = vector.load %arg3[%c0_9, %c0_10, %c0_11] : memref<3x128x64xbf16, #tpu.memory_space<vmem>>, vector<3x128x64xbf16>
    %54 = vector.extract_strided_slice %52 {offsets = [0, 0], sizes = [30, 128], strides = [1, 1]} : vector<32x128xbf16> to vector<30x128xbf16>
    %55 = vector.extract_strided_slice %53 {offsets = [0, 0, 0], sizes = [1, 128, 64], strides = [1, 1, 1]} : vector<3x128x64xbf16> to vector<1x128x64xbf16>
    %56 = vector.shape_cast %55 : vector<1x128x64xbf16> to vector<128x64xbf16>
    %cst_12 = arith.constant dense<0.000000e+00> : vector<30x64xf32>
    %57 = tpu.matmul %54, %56, %cst_12 {dimension_numbers = #tpu.dot_dimension_numbers<[1], [0], [0], [1], [0, 0, 1, 1], [], []>} : vector<30x128xbf16>, vector<128x64xbf16>, vector<30x64xf32> -> vector<30x64xf32>
    %58 = vector.extract_strided_slice %52 {offsets = [1, 0], sizes = [30, 128], strides = [1, 1]} : vector<32x128xbf16> to vector<30x128xbf16>
    %59 = vector.extract_strided_slice %53 {offsets = [1, 0, 0], sizes = [1, 128, 64], strides = [1, 1, 1]} : vector<3x128x64xbf16> to vector<1x128x64xbf16>
    %60 = vector.shape_cast %59 : vector<1x128x64xbf16> to vector<128x64xbf16>
    %cst_13 = arith.constant dense<0.000000e+00> : vector<30x64xf32>
    %61 = tpu.matmul %58, %60, %cst_13 {dimension_numbers = #tpu.dot_dimension_numbers<[1], [0], [0], [1], [0, 0, 1, 1], [], []>} : vector<30x128xbf16>, vector<128x64xbf16>, vector<30x64xf32> -> vector<30x64xf32>
    %62 = arith.addf %57, %61 : vector<30x64xf32>
    %63 = vector.extract_strided_slice %52 {offsets = [2, 0], sizes = [30, 128], strides = [1, 1]} : vector<32x128xbf16> to vector<30x128xbf16>
    %64 = vector.extract_strided_slice %53 {offsets = [2, 0, 0], sizes = [1, 128, 64], strides = [1, 1, 1]} : vector<3x128x64xbf16> to vector<1x128x64xbf16>
    %65 = vector.shape_cast %64 : vector<1x128x64xbf16> to vector<128x64xbf16>
    %cst_14 = arith.constant dense<0.000000e+00> : vector<30x64xf32>
    %66 = tpu.matmul %63, %65, %cst_14 {dimension_numbers = #tpu.dot_dimension_numbers<[1], [0], [0], [1], [0, 0, 1, 1], [], []>} : vector<30x128xbf16>, vector<128x64xbf16>, vector<30x64xf32> -> vector<30x64xf32>
    %67 = arith.addf %62, %66 : vector<30x64xf32>
    %68 = vector.broadcast %0 : vector<1x64xf32> to vector<30x64xf32>
    %69 = arith.addf %67, %68 : vector<30x64xf32>
    %70 = vector.extract_strided_slice %69 {offsets = [0, 0], sizes = [30, 32], strides = [1, 1]} : vector<30x64xf32> to vector<30x32xf32>
    %71 = vector.extract_strided_slice %69 {offsets = [0, 32], sizes = [30, 32], strides = [1, 1]} : vector<30x64xf32> to vector<30x32xf32>
    %72 = arith.negf %71 : vector<30x32xf32>
    %73 = math.exp %72 : vector<30x32xf32>
    %cst_15 = arith.constant 1.000000e+00 : f32
    %74 = vector.broadcast %cst_15 : f32 to vector<30x32xf32>
    %75 = arith.addf %74, %73 : vector<30x32xf32>
    %76 = arith.divf %74, %75 : vector<30x32xf32>
    %77 = arith.mulf %70, %76 : vector<30x32xf32>
    %cst_16 = arith.constant 0.000000e+00 : f32
    %78 = vector.broadcast %cst_16 : f32 to vector<2x32xf32>
    %79 = tpu.concatenate %77, %78 in 0 : vector<30x32xf32>, vector<2x32xf32> -> vector<32x32xf32>
    %c0_17 = arith.constant 0 : index
    %c0_18 = arith.constant 0 : index
    %80 = vector.load %arg5[%c0_17, %c0_18] : memref<32x32xf32, #tpu.memory_space<vmem>>, vector<32x32xf32>
    tpu.vector_store %arg5[%c0_17, %c0_18], %79 {strides = array<i32>} : memref<32x32xf32, #tpu.memory_space<vmem>>, vector<32x32xf32>,
    return
  }
  func.func @transform_0(%arg0: i32) -> (i32, i32) {
    %c0_i32 = arith.constant 0 : i32
    %c0_i32_0 = arith.constant 0 : i32
    return %arg0, %c0_i32 : i32, i32
  }
  func.func @transform_1(%arg0: i32) -> (i32, i32) {
    %c0_i32 = arith.constant 0 : i32
    %c0_i32_0 = arith.constant 0 : i32
    %c0_i32_1 = arith.constant 0 : i32
    return %c0_i32, %c0_i32_0 : i32, i32
  }
  func.func @transform_2(%arg0: i32) -> (i32, i32, i32) {
    %c0_i32 = arith.constant 0 : i32
    %c0_i32_0 = arith.constant 0 : i32
    %c0_i32_1 = arith.constant 0 : i32
    %c0_i32_2 = arith.constant 0 : i32
    return %c0_i32, %c0_i32_0, %c0_i32_1 : i32, i32, i32
  }
  func.func @transform_3(%arg0: i32) -> (i32, i32) {
    %c0_i32 = arith.constant 0 : i32
    %c0_i32_0 = arith.constant 0 : i32
    %c0_i32_1 = arith.constant 0 : i32
    return %c0_i32, %c0_i32_0 : i32, i32
  }
  func.func @transform_4(%arg0: i32) -> (i32, i32) {
    %c0_i32 = arith.constant 0 : i32
    %c0_i32_0 = arith.constant 0 : i32
    return %arg0, %c0_i32 : i32, i32
  }
}

</mosaic_0001>

<llo_original>
// kernel: tpu_custom_call.1
$region0: #{tpu_custom_call.1}
  #allocation0 [shape = 'u32[]', space=smem, size = 0x4, offset = 0x4, fixed_abs, tag = 'smem constant byte address 0x4 - core index']
  #allocation1 [shape = 'u32[144,128]{1,0:T(1,128)}', space=vmem, size = 0x12000, scoped, tag = 'internal scratch']
  %s0 = inlined_call_operand.vmem [shape: bf16[64,768], index: 0, kind: input, shape index: {}]
  %s1 = inlined_call_operand.hbm [shape: bf16[768,256], index: 1, kind: input, shape index: {}]
  %s2 = inlined_call_operand.vmem [shape: bf16[3,128,64], index: 2, kind: input, shape index: {}]
  %s3 = inlined_call_operand.vmem [shape: f32[1,64], index: 3, kind: input, shape index: {}]
  %s4 = inlined_call_operand.vmem [shape: f32[64,32], index: 4, kind: output, shape index: {}]
  %s5 = sld [smem:[#allocation0]]
  $region53: #{tpu_custom_call.1} parent=0
    _
  %s7 = ssub.s32 1, %s5
  %s8 = scalar_select 0, %s7, %s5
  $region1: #{tpu_custom_call.1} parent=0
    #allocation2 [shape = 'u8[393216]{0}', space=vmem, size = 0x60000, scoped, tag = 'input window, operand 1, single buffered']
    #allocation3 [shape = 's32[2]{0}', space=sflag, size = 0x8, scoped, tag = 'scoped memory for tpu_custom_call.1']
    %9 = vsyncpa [#allocation3], 0
    loop: start=0, step=1, limit=4
    $region2: #{tpu_custom_call.1} parent=1 // loop_pre_header
      _
    $region3: #{tpu_custom_call.1} parent=1 // loop_header
      %s11 = sphi 0, %s15
      %p12 = scmp.ge.s32.totalorder %s11, 4
      %s21 = sphi 0, %s23
      %s24 = sphi 0, %s21
      %s25 = sphi 0, %s24
      %s41 = sphi 0, %s25
      %s45 = sphi 0, %s45
      %s47 = sphi 0, %s45
      %s48 = sphi 0, %s47
      %s62 = sphi 0, %s48
      %s66 = sphi 0, %s66
      %s68 = sphi 0, %s66
      %s69 = sphi 0, %s68
      %s83 = sphi 0, %s69
      %s87 = sphi 0, %s87
      %s89 = sphi 0, %s87
      %s90 = sphi 0, %s89
      %s104 = sphi 0, %s90
      %s110 = sphi 0, %s112
      %s113 = sphi 0, %s110
      %s114 = sphi 0, %s113
      %s130 = sphi 0, %s114
    $region4: #{tpu_custom_call.1} parent=1 // loop_header_branch
      %14 = sbr.rel (%p12) target = $region8
    $region5: #{tpu_custom_call.1} parent=1 // loop_body
      %s16 = ssub.s32 %s11, 1
      %s17 = ssub.s32 %s11, 2
      %s18 = sadd.s32 %s11, 1
      %s19 = ssub.s32 %s11, %s18
      %p20 = scmp.eq.s32.totalorder %s19, 0
      %s22 = sadd.s32 %s21, 1
      %s23 = scalar_select %p20, %s21, %s22
      %p26 = pneg %p20
      %p27 = scmp.eq.s32.totalorder %s11, 1
      %p28 = por %p26, %p27
      %p29 = scmp.ne.s32.totalorder %s21, %s24
      %p30 = scmp.eq.s32.totalorder %s11, 0
      %p31 = por %p29, %p30
      %p32 = scmp.ne.s32.totalorder %s21, %s24
      %p33 = scmp.eq.s32.totalorder %s16, 1
      %p34 = por %p32, %p33
      %p35 = scmp.ne.s32.totalorder %s24, %s25
      %p36 = scmp.eq.s32.totalorder %s16, 0
      %p37 = por %p35, %p36
      %p38 = scmp.ne.s32.totalorder %s24, %s25
      %p39 = scmp.eq.s32.totalorder %s17, 1
      %p40 = por %p38, %p39
      %p42 = scmp.ne.s32.totalorder %s25, %s41
      %p43 = scmp.eq.s32.totalorder %s17, 0
      %p44 = por %p42, %p43
      %s46 = sadd.s32 %s45, 1
      %p49 = scmp.eq.s32.totalorder %s11, 1
      %p50 = scmp.ne.s32.totalorder %s45, %s47
      %p51 = scmp.eq.s32.totalorder %s11, 0
      %p52 = por %p50, %p51
      %p53 = scmp.ne.s32.totalorder %s45, %s47
      %p54 = scmp.eq.s32.totalorder %s16, 1
      %p55 = por %p53, %p54
      %p56 = scmp.ne.s32.totalorder %s47, %s48
      %p57 = scmp.eq.s32.totalorder %s16, 0
      %p58 = por %p56, %p57
      %p59 = scmp.ne.s32.totalorder %s47, %s48
      %p60 = scmp.eq.s32.totalorder %s17, 1
      %p61 = por %p59, %p60
      %p63 = scmp.ne.s32.totalorder %s48, %s62
      %p64 = scmp.eq.s32.totalorder %s17, 0
      %p65 = por %p63, %p64
      %s67 = sadd.s32 %s66, 1
      %p70 = scmp.eq.s32.totalorder %s11, 1
      %p71 = scmp.ne.s32.totalorder %s66, %s68
      %p72 = scmp.eq.s32.totalorder %s11, 0
      %p73 = por %p71, %p72
      %p74 = scmp.ne.s32.totalorder %s66, %s68
      %p75 = scmp.eq.s32.totalorder %s16, 1
      %p76 = por %p74, %p75
      %p77 = scmp.ne.s32.totalorder %s68, %s69
      %p78 = scmp.eq.s32.totalorder %s16, 0
      %p79 = por %p77, %p78
      %p80 = scmp.ne.s32.totalorder %s68, %s69
      %p81 = scmp.eq.s32.totalorder %s17, 1
      %p82 = por %p80, %p81
      %p84 = scmp.ne.s32.totalorder %s69, %s83
      %p85 = scmp.eq.s32.totalorder %s17, 0
      %p86 = por %p84, %p85
      %s88 = sadd.s32 %s87, 1
      %p91 = scmp.eq.s32.totalorder %s11, 1
      %p92 = scmp.ne.s32.totalorder %s87, %s89
      %p93 = scmp.eq.s32.totalorder %s11, 0
      %p94 = por %p92, %p93
      %p95 = scmp.ne.s32.totalorder %s87, %s89
      %p96 = scmp.eq.s32.totalorder %s16, 1
      %p97 = por %p95, %p96
      %p98 = scmp.ne.s32.totalorder %s89, %s90
      %p99 = scmp.eq.s32.totalorder %s16, 0
      %p100 = por %p98, %p99
      %p101 = scmp.ne.s32.totalorder %s89, %s90
      %p102 = scmp.eq.s32.totalorder %s17, 1
      %p103 = por %p101, %p102
      %p105 = scmp.ne.s32.totalorder %s90, %s104
      %p106 = scmp.eq.s32.totalorder %s17, 0
      %p107 = por %p105, %p106
      %s108 = ssub.s32 %s11, %s18
      %p109 = scmp.eq.s32.totalorder %s108, 0
      %s111 = sadd.s32 %s110, 1
      %s112 = scalar_select %p109, %s110, %s111
      %p115 = pneg %p109
      %p116 = scmp.eq.s32.totalorder %s11, 1
      %p117 = por %p115, %p116
      %p118 = scmp.ne.s32.totalorder %s110, %s113
      %p119 = scmp.eq.s32.totalorder %s11, 0
      %p120 = por %p118, %p119
      %p121 = scmp.ne.s32.totalorder %s110, %s113
      %p122 = scmp.eq.s32.totalorder %s16, 1
      %p123 = por %p121, %p122
      %p124 = scmp.ne.s32.totalorder %s113, %s114
      %p125 = scmp.eq.s32.totalorder %s16, 0
      %p126 = por %p124, %p125
      %p127 = scmp.ne.s32.totalorder %s113, %s114
      %p128 = scmp.eq.s32.totalorder %s17, 1
      %p129 = por %p127, %p128
      %p131 = scmp.ne.s32.totalorder %s114, %s130
      %p132 = scmp.eq.s32.totalorder %s17, 0
      %p133 = por %p131, %p132
      %p134 = scmp.le.s32.totalorder 1, %s11
      %p135 = scmp.lt.s32.totalorder %s11, 3
      %p136 = pnand %p134, %p135
      %p137 = pneg %p136
      // Predicated region
      $region9: #{tpu_custom_call.1} parent=5 // pred_check
        _
      $region10: #{tpu_custom_call.1} parent=5 // pred_check_branch
        %139 = sbr.rel (%p136) target = $region12
      $region11: #{tpu_custom_call.1} parent=5 // pred_region
        %s140 = ssub.s32 %s11, 1
        // Predicated region
        $region13: #{tpu_custom_call.1} parent=11 // pred_check
          %p141 = pneg %p58
        $region14: #{tpu_custom_call.1} parent=11 // pred_check_branch
          %143 = sbr.rel (%p141) target = $region16
        $region15: #{tpu_custom_call.1} parent=11 // pred_region
          %s145 = ssub.s32 12288, 12288
          %146 = vsyncadd [#allocation3], %s145
          %s147 = sshll.u32 [#allocation2], 4
          %s148 = int_to_ptr.vmem [resolvable:$true] %s147
          %153 = dma.hbm_to_vmem [thread:$0]  %s1, 12288, %s148, [#allocation3], 128, 128, 8
        $region16: #{tpu_custom_call.1} parent=11 // pred_fallthru
          _
        // Predicated region
        $region17: #{tpu_custom_call.1} parent=11 // pred_check
          %p154 = pneg %p79
        $region18: #{tpu_custom_call.1} parent=11 // pred_check_branch
          %156 = sbr.rel (%p154) target = $region20
        $region19: #{tpu_custom_call.1} parent=11 // pred_region
          _
        $region20: #{tpu_custom_call.1} parent=11 // pred_fallthru
          _
        // Predicated region
        $region21: #{tpu_custom_call.1} parent=11 // pred_check
          %p157 = pneg %p100
        $region22: #{tpu_custom_call.1} parent=11 // pred_check_branch
          %159 = sbr.rel (%p157) target = $region24
        $region23: #{tpu_custom_call.1} parent=11 // pred_region
          _
        $region24: #{tpu_custom_call.1} parent=11 // pred_fallthru
          _
      $region12: #{tpu_custom_call.1} parent=5 // pred_fallthru
        _
      %p160 = scmp.lt.s32.totalorder %s11, 2
      // Predicated region
      $region25: #{tpu_custom_call.1} parent=5 // pred_check
        %p161 = pneg %p160
      $region26: #{tpu_custom_call.1} parent=5 // pred_check_branch
        %163 = sbr.rel (%p161) target = $region28
      $region27: #{tpu_custom_call.1} parent=5 // pred_region
        // Predicated region
        $region29: #{tpu_custom_call.1} parent=27 // pred_check
          %p164 = pneg %p31
        $region30: #{tpu_custom_call.1} parent=27 // pred_check_branch
          %166 = sbr.rel (%p164) target = $region32
        $region31: #{tpu_custom_call.1} parent=27 // pred_region
          %s167 = smul.u32 4, %s11
          %p168 = scmp.lt.s32.totalorder %s167, 7
          %s169 = scalar_select %p168, %s167, 7
          %s170 = smul.addr %s169, 6
          %s171 = smul.addr %s170, 4
          %s172 = scalar_lea.vmem %s0, %s171
          %s173 = smul.u32 4, %s11
        $region32: #{tpu_custom_call.1} parent=27 // pred_fallthru
          _
      $region28: #{tpu_custom_call.1} parent=5 // pred_fallthru
        _
      %p174 = scmp.le.s32.totalorder 1, %s11
      %p175 = scmp.lt.s32.totalorder %s11, 3
      %p176 = pnand %p174, %p175
      %p177 = pneg %p176
      // Predicated region
      $region33: #{tpu_custom_call.1} parent=5 // pred_check
        _
      $region34: #{tpu_custom_call.1} parent=5 // pred_check_branch
        %179 = sbr.rel (%p176) target = $region36
      $region35: #{tpu_custom_call.1} parent=5 // pred_region
        %s180 = ssub.s32 %s11, 1
        // Predicated region
        $region37: #{tpu_custom_call.1} parent=35 // pred_check
          %p181 = pneg %p58
        $region38: #{tpu_custom_call.1} parent=35 // pred_check_branch
          %183 = sbr.rel (%p181) target = $region40
        $region39: #{tpu_custom_call.1} parent=35 // pred_region
          %184 = dma.done [#allocation3], 12288
        $region40: #{tpu_custom_call.1} parent=35 // pred_fallthru
          _
        %s185 = smul.u32 4, %s16
        %p186 = scmp.lt.s32.totalorder %s185, 7
        %s187 = scalar_select %p186, %s185, 7
        %s188 = smul.addr %s187, 6
        %s189 = smul.addr %s188, 4
        %s190 = scalar_lea.vmem %s0, %s189
        %p191 = pneg %p37
        %p192 = pneg %p34
        %p193 = pneg %p58
        %p194 = pneg %p55
        %p195 = pneg %p79
        %p196 = pneg %p76
        %p197 = pneg %p100
        %p198 = pneg %p97
        %p199 = pneg %p126
        %p200 = pneg %p123
        %s201 = smul.u32 4, %s16
        %p202 = scmp.lt.s32.totalorder %s201, 7
        %s203 = scalar_select %p202, %s201, 7
        %s204 = smul.addr %s203, 8
        %s205 = scalar_lea.vmem %s4, %s204
        %s206 = smul.u32 4, %s16
        %p207 = scmp.lt.s32.totalorder %s206, 7
        %s208 = scalar_select %p207, %s206, 7
        %s209 = smul.addr %s208, 6
        %s210 = smul.addr %s209, 4
        %s211 = scalar_lea.vmem %s0, %s210
        %s212 = smul.u32 4, %s16
        %s213 = smul.u32 4, %s16
        %p214 = scmp.lt.s32.totalorder %s213, 7
        %s215 = scalar_select %p214, %s213, 7
        %s216 = smul.addr %s215, 8
        %s217 = scalar_lea.vmem %s4, %s216
        %s218 = smul.u32 4, %s16
        %v220 = vld [vmem:[%s3] sm:$0x1]
        %v221 = vld [vmem:[%s211] sm:$0xff]
        %v222 = vld [vmem:[%s211 + $0x8] sm:$0xff]
        %v223 = vld [vmem:[%s211 + $0x10] sm:$0xff]
        %v224 = vld [vmem:[%s211 + $0x18] sm:$0xff]
        %v225 = vld [vmem:[%s211 + $0x20] sm:$0xff]
        %v226 = vld [vmem:[%s211 + $0x28] sm:$0xff]
        %v227 = vld [vmem:[%s211 + $0x30] sm:$0xff]
        %v228 = vld [vmem:[%s211 + $0x38] sm:$0xff]
        %v229 = vld [vmem:[%s211 + $0x40] sm:$0xff]
        %v230 = vld [vmem:[%s211 + $0x48] sm:$0xff]
        %v231 = vld [vmem:[%s211 + $0x50] sm:$0xff]
        %v232 = vld [vmem:[%s211 + $0x58] sm:$0xff]
        %v233 = vld [vmem:[#allocation2] sm:$0xff]
        %v234 = vld [vmem:[#allocation2 + $0x8] sm:$0xff]
        %v235 = vld [vmem:[#allocation2 + $0x10] sm:$0xff]
        %v236 = vld [vmem:[#allocation2 + $0x18] sm:$0xff]
        %v237 = vld [vmem:[#allocation2 + $0x20] sm:$0xff]
        %v238 = vld [vmem:[#allocation2 + $0x28] sm:$0xff]
        %v239 = vld [vmem:[#allocation2 + $0x30] sm:$0xff]
        %v240 = vld [vmem:[#allocation2 + $0x38] sm:$0xff]
        %v241 = vld [vmem:[#allocation2 + $0x40] sm:$0xff]
        %v242 = vld [vmem:[#allocation2 + $0x48] sm:$0xff]
        %v243 = vld [vmem:[#allocation2 + $0x50] sm:$0xff]
        %v244 = vld [vmem:[#allocation2 + $0x58] sm:$0xff]
        %v245 = vld [vmem:[#allocation2 + $0x60] sm:$0xff]
        %v246 = vld [vmem:[#allocation2 + $0x68] sm:$0xff]
        %v247 = vld [vmem:[#allocation2 + $0x70] sm:$0xff]
        %v248 = vld [vmem:[#allocation2 + $0x78] sm:$0xff]
        %v249 = vld [vmem:[#allocation2 + $0x80] sm:$0xff]
        %v250 = vld [vmem:[#allocation2 + $0x88] sm:$0xff]
        %v251 = vld [vmem:[#allocation2 + $0x90] sm:$0xff]
        %v252 = vld [vmem:[#allocation2 + $0x98] sm:$0xff]
        %v253 = vld [vmem:[#allocation2 + $0xa0] sm:$0xff]
        %v254 = vld [vmem:[#allocation2 + $0xa8] sm:$0xff]
        %v255 = vld [vmem:[#allocation2 + $0xb0] sm:$0xff]
        %v256 = vld [vmem:[#allocation2 + $0xb8] sm:$0xff]
        %v257 = vld [vmem:[#allocation2 + $0xc0] sm:$0xff]
        %v258 = vld [vmem:[#allocation2 + $0xc8] sm:$0xff]
        %v259 = vld [vmem:[#allocation2 + $0xd0] sm:$0xff]
        %v260 = vld [vmem:[#allocation2 + $0xd8] sm:$0xff]
        %v261 = vld [vmem:[#allocation2 + $0xe0] sm:$0xff]
        %v262 = vld [vmem:[#allocation2 + $0xe8] sm:$0xff]
        %v263 = vld [vmem:[#allocation2 + $0xf0] sm:$0xff]
        %v264 = vld [vmem:[#allocation2 + $0xf8] sm:$0xff]
        %v265 = vld [vmem:[#allocation2 + $0x100] sm:$0xff]
        %v266 = vld [vmem:[#allocation2 + $0x108] sm:$0xff]
        %v267 = vld [vmem:[#allocation2 + $0x110] sm:$0xff]
        %v268 = vld [vmem:[#allocation2 + $0x118] sm:$0xff]
        %v269 = vld [vmem:[#allocation2 + $0x120] sm:$0xff]
        %v270 = vld [vmem:[#allocation2 + $0x128] sm:$0xff]
        %v271 = vld [vmem:[#allocation2 + $0x130] sm:$0xff]
        %v272 = vld [vmem:[#allocation2 + $0x138] sm:$0xff]
        %v273 = vld [vmem:[#allocation2 + $0x140] sm:$0xff]
        %v274 = vld [vmem:[#allocation2 + $0x148] sm:$0xff]
        %v275 = vld [vmem:[#allocation2 + $0x150] sm:$0xff]
        %v276 = vld [vmem:[#allocation2 + $0x158] sm:$0xff]
        %v277 = vld [vmem:[#allocation2 + $0x160] sm:$0xff]
        %v278 = vld [vmem:[#allocation2 + $0x168] sm:$0xff]
        %v279 = vld [vmem:[#allocation2 + $0x170] sm:$0xff]
        %v280 = vld [vmem:[#allocation2 + $0x178] sm:$0xff]
        %v281 = vld [vmem:[#allocation2 + $0x180] sm:$0xff]
        %v282 = vld [vmem:[#allocation2 + $0x188] sm:$0xff]
        %v283 = vld [vmem:[#allocation2 + $0x190] sm:$0xff]
        %v284 = vld [vmem:[#allocation2 + $0x198] sm:$0xff]
        %v285 = vld [vmem:[#allocation2 + $0x1a0] sm:$0xff]
        %v286 = vld [vmem:[#allocation2 + $0x1a8] sm:$0xff]
        %v287 = vld [vmem:[#allocation2 + $0x1b0] sm:$0xff]
        %v288 = vld [vmem:[#allocation2 + $0x1b8] sm:$0xff]
        %v289 = vld [vmem:[#allocation2 + $0x1c0] sm:$0xff]
        %v290 = vld [vmem:[#allocation2 + $0x1c8] sm:$0xff]
        %v291 = vld [vmem:[#allocation2 + $0x1d0] sm:$0xff]
        %v292 = vld [vmem:[#allocation2 + $0x1d8] sm:$0xff]
        %v293 = vld [vmem:[#allocation2 + $0x1e0] sm:$0xff]
        %v294 = vld [vmem:[#allocation2 + $0x1e8] sm:$0xff]
        %v295 = vld [vmem:[#allocation2 + $0x1f0] sm:$0xff]
        %v296 = vld [vmem:[#allocation2 + $0x1f8] sm:$0xff]
        %v297 = vld [vmem:[#allocation2 + $0x200] sm:$0xff]
        %v298 = vld [vmem:[#allocation2 + $0x208] sm:$0xff]
        %v299 = vld [vmem:[#allocation2 + $0x210] sm:$0xff]
        %v300 = vld [vmem:[#allocation2 + $0x218] sm:$0xff]
        %v301 = vld [vmem:[#allocation2 + $0x220] sm:$0xff]
        %v302 = vld [vmem:[#allocation2 + $0x228] sm:$0xff]
        %v303 = vld [vmem:[#allocation2 + $0x230] sm:$0xff]
        %v304 = vld [vmem:[#allocation2 + $0x238] sm:$0xff]
        %v305 = vld [vmem:[#allocation2 + $0x240] sm:$0xff]
        %v306 = vld [vmem:[#allocation2 + $0x248] sm:$0xff]
        %v307 = vld [vmem:[#allocation2 + $0x250] sm:$0xff]
        %v308 = vld [vmem:[#allocation2 + $0x258] sm:$0xff]
        %v309 = vld [vmem:[#allocation2 + $0x260] sm:$0xff]
        %v310 = vld [vmem:[#allocation2 + $0x268] sm:$0xff]
        %v311 = vld [vmem:[#allocation2 + $0x270] sm:$0xff]
        %v312 = vld [vmem:[#allocation2 + $0x278] sm:$0xff]
        %v313 = vld [vmem:[#allocation2 + $0x280] sm:$0xff]
        %v314 = vld [vmem:[#allocation2 + $0x288] sm:$0xff]
        %v315 = vld [vmem:[#allocation2 + $0x290] sm:$0xff]
        %v316 = vld [vmem:[#allocation2 + $0x298] sm:$0xff]
        %v317 = vld [vmem:[#allocation2 + $0x2a0] sm:$0xff]
        %v318 = vld [vmem:[#allocation2 + $0x2a8] sm:$0xff]
        %v319 = vld [vmem:[#allocation2 + $0x2b0] sm:$0xff]
        %v320 = vld [vmem:[#allocation2 + $0x2b8] sm:$0xff]
        %v321 = vld [vmem:[#allocation2 + $0x2c0] sm:$0xff]
        %v322 = vld [vmem:[#allocation2 + $0x2c8] sm:$0xff]
        %v323 = vld [vmem:[#allocation2 + $0x2d0] sm:$0xff]
        %v324 = vld [vmem:[#allocation2 + $0x2d8] sm:$0xff]
        %v325 = vld [vmem:[#allocation2 + $0x2e0] sm:$0xff]
        %v326 = vld [vmem:[#allocation2 + $0x2e8] sm:$0xff]
        %v327 = vld [vmem:[#allocation2 + $0x2f0] sm:$0xff]
        %v328 = vld [vmem:[#allocation2 + $0x2f8] sm:$0xff]
        %v341 = vunpack.c.l.b16 %v221
        %v342 = vunpack.c.h.b16 %v221
        %v343 = vunpack.c.l.b16 %v222
        %v344 = vunpack.c.h.b16 %v222
        %v345 = vunpack.c.l.b16 %v223
        %v346 = vunpack.c.h.b16 %v223
        %v347 = vunpack.c.l.b16 %v224
        %v348 = vunpack.c.h.b16 %v224
        %v349 = vunpack.c.l.b16 %v225
        %v350 = vunpack.c.h.b16 %v225
        %v351 = vunpack.c.l.b16 %v226
        %v352 = vunpack.c.h.b16 %v226
        %v353 = vunpack.c.l.b16 %v227
        %v354 = vunpack.c.h.b16 %v227
        %v355 = vunpack.c.l.b16 %v228
        %v356 = vunpack.c.h.b16 %v228
        %v357 = vunpack.c.l.b16 %v229
        %v358 = vunpack.c.h.b16 %v229
        %v359 = vunpack.c.l.b16 %v230
        %v360 = vunpack.c.h.b16 %v230
        %v361 = vunpack.c.l.b16 %v231
        %v362 = vunpack.c.h.b16 %v231
        %v363 = vunpack.c.l.b16 %v232
        %v364 = vunpack.c.h.b16 %v232
        %v365 = vpack.c.b16 %v347, %v341
        %v366 = vpack.c.b16 %v348, %v342
        %v367 = vpack.c.b16 %v349, %v343
        %v368 = vpack.c.b16 %v350, %v344
        %v369 = vpack.c.b16 %v351, %v345
        %v370 = vpack.c.b16 %v352, %v346
        %v371 = vpack.c.b16 %v359, %v353
        %v372 = vpack.c.b16 %v360, %v354
        %v373 = vpack.c.b16 %v361, %v355
        %v374 = vpack.c.b16 %v362, %v356
        %v375 = vpack.c.b16 %v363, %v357
        %v376 = vpack.c.b16 %v364, %v358
        %v485 = vunpack.c.l.b16 %v233
        %v486 = vunpack.c.h.b16 %v233
        %v487 = vunpack.c.l.b16 %v234
        %v488 = vunpack.c.h.b16 %v234
        %v489 = vunpack.c.l.b16 %v235
        %v490 = vunpack.c.h.b16 %v235
        %v491 = vunpack.c.l.b16 %v236
        %v492 = vunpack.c.h.b16 %v236
        %v493 = vunpack.c.l.b16 %v237
        %v494 = vunpack.c.h.b16 %v237
        %v495 = vunpack.c.l.b16 %v238
        %v496 = vunpack.c.h.b16 %v238
        %v497 = vunpack.c.l.b16 %v239
        %v498 = vunpack.c.h.b16 %v239
        %v499 = vunpack.c.l.b16 %v240
        %v500 = vunpack.c.h.b16 %v240
        %v501 = vunpack.c.l.b16 %v241
        %v502 = vunpack.c.h.b16 %v241
        %v503 = vunpack.c.l.b16 %v242
        %v504 = vunpack.c.h.b16 %v242
        %v505 = vunpack.c.l.b16 %v243
        %v506 = vunpack.c.h.b16 %v243
        %v507 = vunpack.c.l.b16 %v244
        %v508 = vunpack.c.h.b16 %v244
        %v509 = vunpack.c.l.b16 %v245
        %v510 = vunpack.c.h.b16 %v245
        %v511 = vunpack.c.l.b16 %v246
        %v512 = vunpack.c.h.b16 %v246
        %v513 = vunpack.c.l.b16 %v247
        %v514 = vunpack.c.h.b16 %v247
        %v515 = vunpack.c.l.b16 %v248
        %v516 = vunpack.c.h.b16 %v248
        %v517 = vunpack.c.l.b16 %v249
        %v518 = vunpack.c.h.b16 %v249
        %v519 = vunpack.c.l.b16 %v250
        %v520 = vunpack.c.h.b16 %v250
        %v521 = vunpack.c.l.b16 %v251
        %v522 = vunpack.c.h.b16 %v251
        %v523 = vunpack.c.l.b16 %v252
        %v524 = vunpack.c.h.b16 %v252
        %v525 = vunpack.c.l.b16 %v253
        %v526 = vunpack.c.h.b16 %v253
        %v527 = vunpack.c.l.b16 %v254
        %v528 = vunpack.c.h.b16 %v254
        %v529 = vunpack.c.l.b16 %v255
        %v530 = vunpack.c.h.b16 %v255
        %v531 = vunpack.c.l.b16 %v256
        %v532 = vunpack.c.h.b16 %v256
        %v533 = vunpack.c.l.b16 %v257
        %v534 = vunpack.c.h.b16 %v257
        %v535 = vunpack.c.l.b16 %v258
        %v536 = vunpack.c.h.b16 %v258
        %v537 = vunpack.c.l.b16 %v259
        %v538 = vunpack.c.h.b16 %v259
        %v539 = vunpack.c.l.b16 %v260
        %v540 = vunpack.c.h.b16 %v260
        %v541 = vunpack.c.l.b16 %v261
        %v542 = vunpack.c.h.b16 %v261
        %v543 = vunpack.c.l.b16 %v262
        %v544 = vunpack.c.h.b16 %v262
        %v545 = vunpack.c.l.b16 %v263
        %v546 = vunpack.c.h.b16 %v263
        %v547 = vunpack.c.l.b16 %v264
        %v548 = vunpack.c.h.b16 %v264
        %v549 = vunpack.c.l.b16 %v265
        %v550 = vunpack.c.h.b16 %v265
        %v551 = vunpack.c.l.b16 %v266
        %v552 = vunpack.c.h.b16 %v266
        %v553 = vunpack.c.l.b16 %v267
        %v554 = vunpack.c.h.b16 %v267
        %v555 = vunpack.c.l.b16 %v268
        %v556 = vunpack.c.h.b16 %v268
        %v557 = vunpack.c.l.b16 %v269
        %v558 = vunpack.c.h.b16 %v269
        %v559 = vunpack.c.l.b16 %v270
        %v560 = vunpack.c.h.b16 %v270
        %v561 = vunpack.c.l.b16 %v271
        %v562 = vunpack.c.h.b16 %v271
        %v563 = vunpack.c.l.b16 %v272
        %v564 = vunpack.c.h.b16 %v272
        %v565 = vunpack.c.l.b16 %v273
        %v566 = vunpack.c.h.b16 %v273
        %v567 = vunpack.c.l.b16 %v274
        %v568 = vunpack.c.h.b16 %v274
        %v569 = vunpack.c.l.b16 %v275
        %v570 = vunpack.c.h.b16 %v275
        %v571 = vunpack.c.l.b16 %v276
        %v572 = vunpack.c.h.b16 %v276
        %v573 = vunpack.c.l.b16 %v277
        %v574 = vunpack.c.h.b16 %v277
        %v575 = vunpack.c.l.b16 %v278
        %v576 = vunpack.c.h.b16 %v278
        %v577 = vunpack.c.l.b16 %v279
        %v578 = vunpack.c.h.b16 %v279
        %v579 = vunpack.c.l.b16 %v280
        %v580 = vunpack.c.h.b16 %v280
        %v581 = vunpack.c.l.b16 %v281
        %v582 = vunpack.c.h.b16 %v281
        %v583 = vunpack.c.l.b16 %v282
        %v584 = vunpack.c.h.b16 %v282
        %v585 = vunpack.c.l.b16 %v283
        %v586 = vunpack.c.h.b16 %v283
        %v587 = vunpack.c.l.b16 %v284
        %v588 = vunpack.c.h.b16 %v284
        %v589 = vunpack.c.l.b16 %v285
        %v590 = vunpack.c.h.b16 %v285
        %v591 = vunpack.c.l.b16 %v286
        %v592 = vunpack.c.h.b16 %v286
        %v593 = vunpack.c.l.b16 %v287
        %v594 = vunpack.c.h.b16 %v287
        %v595 = vunpack.c.l.b16 %v288
        %v596 = vunpack.c.h.b16 %v288
        %v597 = vunpack.c.l.b16 %v289
        %v598 = vunpack.c.h.b16 %v289
        %v599 = vunpack.c.l.b16 %v290
        %v600 = vunpack.c.h.b16 %v290
        %v601 = vunpack.c.l.b16 %v291
        %v602 = vunpack.c.h.b16 %v291
        %v603 = vunpack.c.l.b16 %v292
        %v604 = vunpack.c.h.b16 %v292
        %v605 = vunpack.c.l.b16 %v293
        %v606 = vunpack.c.h.b16 %v293
        %v607 = vunpack.c.l.b16 %v294
        %v608 = vunpack.c.h.b16 %v294
        %v609 = vunpack.c.l.b16 %v295
        %v610 = vunpack.c.h.b16 %v295
        %v611 = vunpack.c.l.b16 %v296
        %v612 = vunpack.c.h.b16 %v296
        %v613 = vunpack.c.l.b16 %v297
        %v614 = vunpack.c.h.b16 %v297
        %v615 = vunpack.c.l.b16 %v298
        %v616 = vunpack.c.h.b16 %v298
        %v617 = vunpack.c.l.b16 %v299
        %v618 = vunpack.c.h.b16 %v299
        %v619 = vunpack.c.l.b16 %v300
        %v620 = vunpack.c.h.b16 %v300
        %v621 = vunpack.c.l.b16 %v301
        %v622 = vunpack.c.h.b16 %v301
        %v623 = vunpack.c.l.b16 %v302
        %v624 = vunpack.c.h.b16 %v302
        %v625 = vunpack.c.l.b16 %v303
        %v626 = vunpack.c.h.b16 %v303
        %v627 = vunpack.c.l.b16 %v304
        %v628 = vunpack.c.h.b16 %v304
        %v629 = vunpack.c.l.b16 %v305
        %v630 = vunpack.c.h.b16 %v305
        %v631 = vunpack.c.l.b16 %v306
        %v632 = vunpack.c.h.b16 %v306
        %v633 = vunpack.c.l.b16 %v307
        %v634 = vunpack.c.h.b16 %v307
        %v635 = vunpack.c.l.b16 %v308
        %v636 = vunpack.c.h.b16 %v308
        %v637 = vunpack.c.l.b16 %v309
        %v638 = vunpack.c.h.b16 %v309
        %v639 = vunpack.c.l.b16 %v310
        %v640 = vunpack.c.h.b16 %v310
        %v641 = vunpack.c.l.b16 %v311
        %v642 = vunpack.c.h.b16 %v311
        %v643 = vunpack.c.l.b16 %v312
        %v644 = vunpack.c.h.b16 %v312
        %v645 = vunpack.c.l.b16 %v313
        %v646 = vunpack.c.h.b16 %v313
        %v647 = vunpack.c.l.b16 %v314
        %v648 = vunpack.c.h.b16 %v314
        %v649 = vunpack.c.l.b16 %v315
        %v650 = vunpack.c.h.b16 %v315
        %v651 = vunpack.c.l.b16 %v316
        %v652 = vunpack.c.h.b16 %v316
        %v653 = vunpack.c.l.b16 %v317
        %v654 = vunpack.c.h.b16 %v317
        %v655 = vunpack.c.l.b16 %v318
        %v656 = vunpack.c.h.b16 %v318
        %v657 = vunpack.c.l.b16 %v319
        %v658 = vunpack.c.h.b16 %v319
        %v659 = vunpack.c.l.b16 %v320
        %v660 = vunpack.c.h.b16 %v320
        %v661 = vunpack.c.l.b16 %v321
        %v662 = vunpack.c.h.b16 %v321
        %v663 = vunpack.c.l.b16 %v322
        %v664 = vunpack.c.h.b16 %v322
        %v665 = vunpack.c.l.b16 %v323
        %v666 = vunpack.c.h.b16 %v323
        %v667 = vunpack.c.l.b16 %v324
        %v668 = vunpack.c.h.b16 %v324
        %v669 = vunpack.c.l.b16 %v325
        %v670 = vunpack.c.h.b16 %v325
        %v671 = vunpack.c.l.b16 %v326
        %v672 = vunpack.c.h.b16 %v326
        %v673 = vunpack.c.l.b16 %v327
        %v674 = vunpack.c.h.b16 %v327
        %v675 = vunpack.c.l.b16 %v328
        %v676 = vunpack.c.h.b16 %v328
        %v677 = vpack.c.b16 %v487, %v485
        %v678 = vpack.c.b16 %v488, %v486
        %v679 = vpack.c.b16 %v491, %v489
        %v680 = vpack.c.b16 %v492, %v490
        %v681 = vpack.c.b16 %v495, %v493
        %v682 = vpack.c.b16 %v496, %v494
        %v683 = vpack.c.b16 %v499, %v497
        %v684 = vpack.c.b16 %v500, %v498
        %v685 = vpack.c.b16 %v503, %v501
        %v686 = vpack.c.b16 %v504, %v502
        %v687 = vpack.c.b16 %v507, %v505
        %v688 = vpack.c.b16 %v508, %v506
        %v689 = vpack.c.b16 %v511, %v509
        %v690 = vpack.c.b16 %v512, %v510
        %v691 = vpack.c.b16 %v515, %v513
        %v692 = vpack.c.b16 %v516, %v514
        %v693 = vpack.c.b16 %v519, %v517
        %v694 = vpack.c.b16 %v520, %v518
        %v695 = vpack.c.b16 %v523, %v521
        %v696 = vpack.c.b16 %v524, %v522
        %v697 = vpack.c.b16 %v527, %v525
        %v698 = vpack.c.b16 %v528, %v526
        %v699 = vpack.c.b16 %v531, %v529
        %v700 = vpack.c.b16 %v532, %v530
        %v701 = vpack.c.b16 %v535, %v533
        %v702 = vpack.c.b16 %v536, %v534
        %v703 = vpack.c.b16 %v539, %v537
        %v704 = vpack.c.b16 %v540, %v538
        %v705 = vpack.c.b16 %v543, %v541
        %v706 = vpack.c.b16 %v544, %v542
        %v707 = vpack.c.b16 %v547, %v545
        %v708 = vpack.c.b16 %v548, %v546
        %v709 = vpack.c.b16 %v551, %v549
        %v710 = vpack.c.b16 %v552, %v550
        %v711 = vpack.c.b16 %v555, %v553
        %v712 = vpack.c.b16 %v556, %v554
        %v713 = vpack.c.b16 %v559, %v557
        %v714 = vpack.c.b16 %v560, %v558
        %v715 = vpack.c.b16 %v563, %v561
        %v716 = vpack.c.b16 %v564, %v562
        %v717 = vpack.c.b16 %v567, %v565
        %v718 = vpack.c.b16 %v568, %v566
        %v719 = vpack.c.b16 %v571, %v569
        %v720 = vpack.c.b16 %v572, %v570
        %v721 = vpack.c.b16 %v575, %v573
        %v722 = vpack.c.b16 %v576, %v574
        %v723 = vpack.c.b16 %v579, %v577
        %v724 = vpack.c.b16 %v580, %v578
        %v725 = vpack.c.b16 %v583, %v581
        %v726 = vpack.c.b16 %v584, %v582
        %v727 = vpack.c.b16 %v587, %v585
        %v728 = vpack.c.b16 %v588, %v586
        %v729 = vpack.c.b16 %v591, %v589
        %v730 = vpack.c.b16 %v592, %v590
        %v731 = vpack.c.b16 %v595, %v593
        %v732 = vpack.c.b16 %v596, %v594
        %v733 = vpack.c.b16 %v599, %v597
        %v734 = vpack.c.b16 %v600, %v598
        %v735 = vpack.c.b16 %v603, %v601
        %v736 = vpack.c.b16 %v604, %v602
        %v737 = vpack.c.b16 %v607, %v605
        %v738 = vpack.c.b16 %v608, %v606
        %v739 = vpack.c.b16 %v611, %v609
        %v740 = vpack.c.b16 %v612, %v610
        %v741 = vpack.c.b16 %v615, %v613
        %v742 = vpack.c.b16 %v616, %v614
        %v743 = vpack.c.b16 %v619, %v617
        %v744 = vpack.c.b16 %v620, %v618
        %v745 = vpack.c.b16 %v623, %v621
        %v746 = vpack.c.b16 %v624, %v622
        %v747 = vpack.c.b16 %v627, %v625
        %v748 = vpack.c.b16 %v628, %v626
        %v749 = vpack.c.b16 %v631, %v629
        %v750 = vpack.c.b16 %v632, %v630
        %v751 = vpack.c.b16 %v635, %v633
        %v752 = vpack.c.b16 %v636, %v634
        %v753 = vpack.c.b16 %v639, %v637
        %v754 = vpack.c.b16 %v640, %v638
        %v755 = vpack.c.b16 %v643, %v641
        %v756 = vpack.c.b16 %v644, %v642
        %v757 = vpack.c.b16 %v647, %v645
        %v758 = vpack.c.b16 %v648, %v646
        %v759 = vpack.c.b16 %v651, %v649
        %v760 = vpack.c.b16 %v652, %v650
        %v761 = vpack.c.b16 %v655, %v653
        %v762 = vpack.c.b16 %v656, %v654
        %v763 = vpack.c.b16 %v659, %v657
        %v764 = vpack.c.b16 %v660, %v658
        %v765 = vpack.c.b16 %v663, %v661
        %v766 = vpack.c.b16 %v664, %v662
        %v767 = vpack.c.b16 %v667, %v665
        %v768 = vpack.c.b16 %v668, %v666
        %v769 = vpack.c.b16 %v671, %v669
        %v770 = vpack.c.b16 %v672, %v670
        %v771 = vpack.c.b16 %v675, %v673
        %v772 = vpack.c.b16 %v676, %v674
        %869 = vmatprep.subr.bf16.mxu0 %v678
        %870 = vmatpush1.bf16.msra.mxu0 %v677
        %871 = vmatprep.subr.bf16.mxu0 %v680
        %872 = vmatpush1.bf16.msra.mxu0 %v679
        %873 = vmatprep.subr.bf16.mxu0 %v682
        %874 = vmatpush1.bf16.msra.mxu0 %v681
        %875 = vmatprep.subr.bf16.mxu0 %v684
        %876 = vmatpush1.bf16.msra.mxu0 %v683
        %877 = vmatprep.subr.bf16.mxu0 %v686
        %878 = vmatpush1.bf16.msra.mxu0 %v685
        %879 = vmatprep.subr.bf16.mxu0 %v688
        %880 = vmatpush1.bf16.msra.mxu0 %v687
        %881 = vmatprep.subr.bf16.mxu0 %v690
        %882 = vmatpush1.bf16.msra.mxu0 %v689
        %883 = vmatprep.subr.bf16.mxu0 %v692
        %884 = vmatpush1.bf16.msra.mxu0 %v691
        %885 = vmatprep.subr.bf16.mxu0 %v694
        %886 = vmatpush1.bf16.msra.mxu0 %v693
        %887 = vmatprep.subr.bf16.mxu0 %v696
        %888 = vmatpush1.bf16.msra.mxu0 %v695
        %889 = vmatprep.subr.bf16.mxu0 %v698
        %890 = vmatpush1.bf16.msra.mxu0 %v697
        %891 = vmatprep.subr.bf16.mxu0 %v700
        %892 = vmatpush1.bf16.msra.mxu0 %v699
        %893 = vmatprep.subr.bf16.mxu0 %v702
        %894 = vmatpush1.bf16.msra.mxu0 %v701
        %895 = vmatprep.subr.bf16.mxu0 %v704
        %896 = vmatpush1.bf16.msra.mxu0 %v703
        %897 = vmatprep.subr.bf16.mxu0 %v706
        %898 = vmatpush1.bf16.msra.mxu0 %v705
        %899 = vmatprep.subr.bf16.mxu0 %v708
        %900 = vmatpush1.bf16.msra.mxu0 %v707
        %901 = vmatprep.mubr.bf16.mxu0 %v366
        %902 = vmatmul.mubr.bf16.gmra.mrb[0].mxu0 %v365
        %v903 = vpop.f32.mrb[0].mxu0
        %v904 = vadd.f32 0.0, %v903
        %v905 = vpop.f32.mrb[0].mxu0
        %v906 = vadd.f32 0.0, %v905
        %v907 = vpop.f32.mrb[0].mxu0
        %v908 = vadd.f32 0.0, %v907
        %v909 = vpop.f32.mrb[0].mxu0
        %v910 = vadd.f32 0.0, %v909
        %911 = vmatprep.mubr.bf16.mxu0 %v372
        %912 = vmatmul.mubr.bf16.gmra.mrb[0].mxu0 %v371
        %v913 = vpop.f32.mrb[0].mxu0
        %v914 = vadd.f32 0.0, %v913
        %v915 = vpop.f32.mrb[0].mxu0
        %v916 = vadd.f32 0.0, %v915
        %v917 = vpop.f32.mrb[0].mxu0
        %v918 = vadd.f32 0.0, %v917
        %v919 = vpop.f32.mrb[0].mxu0
        %v920 = vadd.f32 0.0, %v919
        %921 = vdwg.mxu0
        %922 = vmatprep.subr.bf16.mxu0 %v710
        %923 = vmatpush1.bf16.msra.mxu0 %v709
        %924 = vmatprep.subr.bf16.mxu0 %v712
        %925 = vmatpush1.bf16.msra.mxu0 %v711
        %926 = vmatprep.subr.bf16.mxu0 %v714
        %927 = vmatpush1.bf16.msra.mxu0 %v713
        %928 = vmatprep.subr.bf16.mxu0 %v716
        %929 = vmatpush1.bf16.msra.mxu0 %v715
        %930 = vmatprep.subr.bf16.mxu0 %v718
        %931 = vmatpush1.bf16.msra.mxu0 %v717
        %932 = vmatprep.subr.bf16.mxu0 %v720
        %933 = vmatpush1.bf16.msra.mxu0 %v719
        %934 = vmatprep.subr.bf16.mxu0 %v722
        %935 = vmatpush1.bf16.msra.mxu0 %v721
        %936 = vmatprep.subr.bf16.mxu0 %v724
        %937 = vmatpush1.bf16.msra.mxu0 %v723
        %938 = vmatprep.subr.bf16.mxu0 %v726
        %939 = vmatpush1.bf16.msra.mxu0 %v725
        %940 = vmatprep.subr.bf16.mxu0 %v728
        %941 = vmatpush1.bf16.msra.mxu0 %v727
        %942 = vmatprep.subr.bf16.mxu0 %v730
        %943 = vmatpush1.bf16.msra.mxu0 %v729
        %944 = vmatprep.subr.bf16.mxu0 %v732
        %945 = vmatpush1.bf16.msra.mxu0 %v731
        %946 = vmatprep.subr.bf16.mxu0 %v734
        %947 = vmatpush1.bf16.msra.mxu0 %v733
        %948 = vmatprep.subr.bf16.mxu0 %v736
        %949 = vmatpush1.bf16.msra.mxu0 %v735
        %950 = vmatprep.subr.bf16.mxu0 %v738
        %951 = vmatpush1.bf16.msra.mxu0 %v737
        %952 = vmatprep.subr.bf16.mxu0 %v740
        %953 = vmatpush1.bf16.msra.mxu0 %v739
        %954 = vmatprep.mubr.bf16.mxu0 %v368
        %955 = vmatmul.mubr.bf16.gmra.mrb[0].mxu0 %v367
        %v956 = vpop.f32.mrb[0].mxu0
        %v957 = vadd.f32 %v904, %v956
        %v958 = vpop.f32.mrb[0].mxu0
        %v959 = vadd.f32 %v906, %v958
        %v960 = vpop.f32.mrb[0].mxu0
        %v961 = vadd.f32 %v908, %v960
        %v962 = vpop.f32.mrb[0].mxu0
        %v963 = vadd.f32 %v910, %v962
        %964 = vmatprep.mubr.bf16.mxu0 %v374
        %965 = vmatmul.mubr.bf16.gmra.mrb[0].mxu0 %v373
        %v966 = vpop.f32.mrb[0].mxu0
        %v967 = vadd.f32 %v914, %v966
        %v968 = vpop.f32.mrb[0].mxu0
        %v969 = vadd.f32 %v916, %v968
        %v970 = vpop.f32.mrb[0].mxu0
        %v971 = vadd.f32 %v918, %v970
        %v972 = vpop.f32.mrb[0].mxu0
        %v973 = vadd.f32 %v920, %v972
        %974 = vdwg.mxu0
        %975 = vmatprep.subr.bf16.mxu0 %v742
        %976 = vmatpush1.bf16.msra.mxu0 %v741
        %977 = vmatprep.subr.bf16.mxu0 %v744
        %978 = vmatpush1.bf16.msra.mxu0 %v743
        %979 = vmatprep.subr.bf16.mxu0 %v746
        %980 = vmatpush1.bf16.msra.mxu0 %v745
        %981 = vmatprep.subr.bf16.mxu0 %v748
        %982 = vmatpush1.bf16.msra.mxu0 %v747
        %983 = vmatprep.subr.bf16.mxu0 %v750
        %984 = vmatpush1.bf16.msra.mxu0 %v749
        %985 = vmatprep.subr.bf16.mxu0 %v752
        %986 = vmatpush1.bf16.msra.mxu0 %v751
        %987 = vmatprep.subr.bf16.mxu0 %v754
        %988 = vmatpush1.bf16.msra.mxu0 %v753
        %989 = vmatprep.subr.bf16.mxu0 %v756
        %990 = vmatpush1.bf16.msra.mxu0 %v755
        %991 = vmatprep.subr.bf16.mxu0 %v758
        %992 = vmatpush1.bf16.msra.mxu0 %v757
        %993 = vmatprep.subr.bf16.mxu0 %v760
        %994 = vmatpush1.bf16.msra.mxu0 %v759
        %995 = vmatprep.subr.bf16.mxu0 %v762
        %996 = vmatpush1.bf16.msra.mxu0 %v761
        %997 = vmatprep.subr.bf16.mxu0 %v764
        %998 = vmatpush1.bf16.msra.mxu0 %v763
        %999 = vmatprep.subr.bf16.mxu0 %v766
        %1000 = vmatpush1.bf16.msra.mxu0 %v765
        %1001 = vmatprep.subr.bf16.mxu0 %v768
        %1002 = vmatpush1.bf16.msra.mxu0 %v767
        %1003 = vmatprep.subr.bf16.mxu0 %v770
        %1004 = vmatpush1.bf16.msra.mxu0 %v769
        %1005 = vmatprep.subr.bf16.mxu0 %v772
        %1006 = vmatpush1.bf16.msra.mxu0 %v771
        %1007 = vmatprep.mubr.bf16.mxu0 %v370
        %1008 = vmatmul.mubr.bf16.gmra.mrb[0].mxu0 %v369
        %v1009 = vpop.f32.mrb[0].mxu0
        %v1010 = vadd.f32 %v957, %v1009
        %v1011 = vpop.f32.mrb[0].mxu0
        %v1012 = vadd.f32 %v959, %v1011
        %v1013 = vpop.f32.mrb[0].mxu0
        %v1014 = vadd.f32 %v961, %v1013
        %v1015 = vpop.f32.mrb[0].mxu0
        %v1016 = vadd.f32 %v963, %v1015
        %1017 = vmatprep.mubr.bf16.mxu0 %v376
        %1018 = vmatmul.mubr.bf16.gmra.mrb[0].mxu0 %v375
        %v1019 = vpop.f32.mrb[0].mxu0
        %v1020 = vadd.f32 %v967, %v1019
        %v1021 = vpop.f32.mrb[0].mxu0
        %v1022 = vadd.f32 %v969, %v1021
        %v1023 = vpop.f32.mrb[0].mxu0
        %v1024 = vadd.f32 %v971, %v1023
        %v1025 = vpop.f32.mrb[0].mxu0
        %v1026 = vadd.f32 %v973, %v1025
        %1027 = vdwg.mxu0
        %v1029 = vlaneseq
        %v1030 = vshrl.u32 %v1029, 7
        %v1031 = vsub.s32 0, %v1030
        %v1032 = vrot.slane %v220, %v1031
        %v1034 = vadd.f32 %v1010, %v1032
        %v1035 = vadd.f32 %v1014, %v1032
        %v1036 = vadd.f32 %v1020, %v1032
        %v1037 = vadd.f32 %v1024, %v1032
        %v1038 = vxor.u32 %v1034, 2147483648
        %v1039 = vxor.u32 %v1035, 2147483648
        %v1040 = vxor.u32 %v1036, 2147483648
        %v1041 = vxor.u32 %v1037, 2147483648
        %v1042 = vmul.f32 %v1038, 1.442695
        %v1043 = vpow.pop %v1042
        %v1044 = vmul.f32 %v1039, 1.442695
        %v1045 = vpow.pop %v1044
        %v1046 = vmul.f32 %v1040, 1.442695
        %v1047 = vpow.pop %v1046
        %v1048 = vmul.f32 %v1041, 1.442695
        %v1049 = vpow.pop %v1048
        %v1050 = vadd.f32 %v1043, 1.0
        %v1051 = vadd.f32 %v1045, 1.0
        %v1052 = vadd.f32 %v1047, 1.0
        %v1053 = vadd.f32 %v1049, 1.0
        %v1054 = vrcp.pop %v1050
        %v1055 = vmul.f32 1.0, %v1054
        %v1056 = vrcp.pop %v1051
        %v1057 = vmul.f32 1.0, %v1056
        %v1058 = vrcp.pop %v1052
        %v1059 = vmul.f32 1.0, %v1058
        %v1060 = vrcp.pop %v1053
        %v1061 = vmul.f32 1.0, %v1060
        %1066 = vrot.lane.b32.xlu0 %v1055, 96
        %v1067 = vpop.permute.xlu0 %1066
        %1068 = vrot.lane.b32.xlu0 %v1057, 96
        %v1069 = vpop.permute.xlu0 %1068
        %1070 = vrot.lane.b32.xlu0 %v1059, 96
        %v1071 = vpop.permute.xlu0 %1070
        %1072 = vrot.lane.b32.xlu0 %v1061, 96
        %v1073 = vpop.permute.xlu0 %1072
        %v1078 = vmul.f32 %v1034, %v1067
        %v1079 = vmul.f32 %v1035, %v1069
        %v1080 = vmul.f32 %v1036, %v1071
        %v1081 = vmul.f32 %v1037, %v1073
        %v1082 = vpack.c.bf16 %v1079, %v1078
        %v1083 = vpack.c.bf16 %v1081, %v1080
        %1084 = vrot.lane.b32.xlu0 %v1032, 64
        %v1085 = vpop.permute.xlu0 %1084
        %v1087 = vadd.f32 %v1010, %v1085
        %v1088 = vadd.f32 %v1014, %v1085
        %v1089 = vadd.f32 %v1020, %v1085
        %v1090 = vadd.f32 %v1024, %v1085
        %v1091 = vxor.u32 %v1087, 2147483648
        %v1092 = vxor.u32 %v1088, 2147483648
        %v1093 = vxor.u32 %v1089, 2147483648
        %v1094 = vxor.u32 %v1090, 2147483648
        %v1095 = vmul.f32 %v1091, 1.442695
        %v1096 = vpow.pop %v1095
        %v1097 = vmul.f32 %v1092, 1.442695
        %v1098 = vpow.pop %v1097
        %v1099 = vmul.f32 %v1093, 1.442695
        %v1100 = vpow.pop %v1099
        %v1101 = vmul.f32 %v1094, 1.442695
        %v1102 = vpow.pop %v1101
        %v1103 = vadd.f32 %v1096, 1.0
        %v1104 = vadd.f32 %v1098, 1.0
        %v1105 = vadd.f32 %v1100, 1.0
        %v1106 = vadd.f32 %v1102, 1.0
        %v1107 = vrcp.pop %v1103
        %v1108 = vmul.f32 1.0, %v1107
        %v1109 = vrcp.pop %v1104
        %v1110 = vmul.f32 1.0, %v1109
        %v1111 = vrcp.pop %v1105
        %v1112 = vmul.f32 1.0, %v1111
        %v1113 = vrcp.pop %v1106
        %v1114 = vmul.f32 1.0, %v1113
        %1119 = vrot.lane.b32.xlu0 %v1108, 96
        %v1120 = vpop.permute.xlu0 %1119
        %1121 = vrot.lane.b32.xlu0 %v1110, 96
        %v1122 = vpop.permute.xlu0 %1121
        %1123 = vrot.lane.b32.xlu0 %v1112, 96
        %v1124 = vpop.permute.xlu0 %1123
        %1125 = vrot.lane.b32.xlu0 %v1114, 96
        %v1126 = vpop.permute.xlu0 %1125
        %v1131 = vmul.f32 %v1087, %v1120
        %v1132 = vmul.f32 %v1088, %v1122
        %v1133 = vmul.f32 %v1089, %v1124
        %v1134 = vmul.f32 %v1090, %v1126
        %v1135 = vpack.c.bf16 %v1132, %v1131
        %v1136 = vpack.c.bf16 %v1134, %v1133
        %v1137 = vadd.f32 %v1012, %v1032
        %v1138 = vadd.f32 %v1016, %v1032
        %v1139 = vadd.f32 %v1022, %v1032
        %v1140 = vadd.f32 %v1026, %v1032
        %v1141 = vxor.u32 %v1137, 2147483648
        %v1142 = vxor.u32 %v1138, 2147483648
        %v1143 = vxor.u32 %v1139, 2147483648
        %v1144 = vxor.u32 %v1140, 2147483648
        %v1145 = vmul.f32 %v1141, 1.442695
        %v1146 = vpow.pop %v1145
        %v1147 = vmul.f32 %v1142, 1.442695
        %v1148 = vpow.pop %v1147
        %v1149 = vmul.f32 %v1143, 1.442695
        %v1150 = vpow.pop %v1149
        %v1151 = vmul.f32 %v1144, 1.442695
        %v1152 = vpow.pop %v1151
        %v1153 = vadd.f32 %v1146, 1.0
        %v1154 = vadd.f32 %v1148, 1.0
        %v1155 = vadd.f32 %v1150, 1.0
        %v1156 = vadd.f32 %v1152, 1.0
        %v1157 = vrcp.pop %v1153
        %v1158 = vmul.f32 1.0, %v1157
        %v1159 = vrcp.pop %v1154
        %v1160 = vmul.f32 1.0, %v1159
        %v1161 = vrcp.pop %v1155
        %v1162 = vmul.f32 1.0, %v1161
        %v1163 = vrcp.pop %v1156
        %v1164 = vmul.f32 1.0, %v1163
        %1169 = vrot.lane.b32.xlu0 %v1158, 96
        %v1170 = vpop.permute.xlu0 %1169
        %1171 = vrot.lane.b32.xlu0 %v1160, 96
        %v1172 = vpop.permute.xlu0 %1171
        %1173 = vrot.lane.b32.xlu0 %v1162, 96
        %v1174 = vpop.permute.xlu0 %1173
        %1175 = vrot.lane.b32.xlu0 %v1164, 96
        %v1176 = vpop.permute.xlu0 %1175
        %v1181 = vmul.f32 %v1137, %v1170
        %v1182 = vmul.f32 %v1138, %v1172
        %v1183 = vmul.f32 %v1139, %v1174
        %v1184 = vmul.f32 %v1140, %v1176
        %v1185 = vpack.c.bf16 %v1182, %v1181
        %v1186 = vpack.c.bf16 %v1184, %v1183
        %v1187 = vadd.f32 %v1012, %v1085
        %v1188 = vadd.f32 %v1016, %v1085
        %v1189 = vadd.f32 %v1022, %v1085
        %v1190 = vadd.f32 %v1026, %v1085
        %v1191 = vxor.u32 %v1187, 2147483648
        %v1192 = vxor.u32 %v1188, 2147483648
        %v1193 = vxor.u32 %v1189, 2147483648
        %v1194 = vxor.u32 %v1190, 2147483648
        %v1195 = vmul.f32 %v1191, 1.442695
        %v1196 = vpow.pop %v1195
        %v1197 = vmul.f32 %v1192, 1.442695
        %v1198 = vpow.pop %v1197
        %v1199 = vmul.f32 %v1193, 1.442695
        %v1200 = vpow.pop %v1199
        %v1201 = vmul.f32 %v1194, 1.442695
        %v1202 = vpow.pop %v1201
        %v1203 = vadd.f32 %v1196, 1.0
        %v1204 = vadd.f32 %v1198, 1.0
        %v1205 = vadd.f32 %v1200, 1.0
        %v1206 = vadd.f32 %v1202, 1.0
        %v1207 = vrcp.pop %v1203
        %v1208 = vmul.f32 1.0, %v1207
        %v1209 = vrcp.pop %v1204
        %v1210 = vmul.f32 1.0, %v1209
        %v1211 = vrcp.pop %v1205
        %v1212 = vmul.f32 1.0, %v1211
        %v1213 = vrcp.pop %v1206
        %v1214 = vmul.f32 1.0, %v1213
        %1219 = vrot.lane.b32.xlu0 %v1208, 96
        %v1220 = vpop.permute.xlu0 %1219
        %1221 = vrot.lane.b32.xlu0 %v1210, 96
        %v1222 = vpop.permute.xlu0 %1221
        %1223 = vrot.lane.b32.xlu0 %v1212, 96
        %v1224 = vpop.permute.xlu0 %1223
        %1225 = vrot.lane.b32.xlu0 %v1214, 96
        %v1226 = vpop.permute.xlu0 %1225
        %v1231 = vmul.f32 %v1187, %v1220
        %v1232 = vmul.f32 %v1188, %v1222
        %v1233 = vmul.f32 %v1189, %v1224
        %v1234 = vmul.f32 %v1190, %v1226
        %v1235 = vpack.c.bf16 %v1232, %v1231
        %v1236 = vpack.c.bf16 %v1234, %v1233
        %1239 = vrot.lane.b32.xlu0 %v1135, 96
        %v1240 = vpop.permute.xlu0 %1239
        %1241 = vrot.lane.b32.xlu0 %v1136, 96
        %v1242 = vpop.permute.xlu0 %1241
        %1245 = vrot.lane.b32.xlu0 %v1185, 64
        %v1246 = vpop.permute.xlu0 %1245
        %1247 = vrot.lane.b32.xlu0 %v1186, 64
        %v1248 = vpop.permute.xlu0 %1247
        %1251 = vrot.lane.b32.xlu0 %v1235, 32
        %v1252 = vpop.permute.xlu0 %1251
        %1253 = vrot.lane.b32.xlu0 %v1236, 32
        %v1254 = vpop.permute.xlu0 %1253
        %vm1255 = vcmask 261120
        %v1258 = vsel %vm1255, %v1082, %v1240
        %v1261 = vsel %vm1255, %v1083, %v1242
        %vm1262 = vcmask 523264
        %v1264 = vsel %vm1262, %v1258, %v1246
        %v1266 = vsel %vm1262, %v1261, %v1248
        %vm1267 = vcmask 785408
        %v1269 = vsel %vm1267, %v1264, %v1252
        %v1272 = vsel %vm1267, %v1266, %v1254
        %v1274 = vld [vmem:[%s2] sm:$0xf]
        %v1275 = vld [vmem:[%s2 + $0x4] sm:$0xf]
        %v1276 = vld [vmem:[%s2 + $0x8] sm:$0xf]
        %v1277 = vld [vmem:[%s2 + $0xc] sm:$0xf]
        %v1278 = vld [vmem:[%s2 + $0x10] sm:$0xf]
        %v1279 = vld [vmem:[%s2 + $0x14] sm:$0xf]
        %v1280 = vld [vmem:[%s2 + $0x18] sm:$0xf]
        %v1281 = vld [vmem:[%s2 + $0x1c] sm:$0xf]
        %v1282 = vld [vmem:[%s2 + $0x20] sm:$0xf]
        %v1283 = vld [vmem:[%s2 + $0x24] sm:$0xf]
        %v1284 = vld [vmem:[%s2 + $0x28] sm:$0xf]
        %v1285 = vld [vmem:[%s2 + $0x2c] sm:$0xf]
        %v1286 = vld [vmem:[%s2 + $0x30] sm:$0xf]
        %v1287 = vld [vmem:[%s2 + $0x34] sm:$0xf]
        %v1288 = vld [vmem:[%s2 + $0x38] sm:$0xf]
        %v1289 = vld [vmem:[%s2 + $0x3c] sm:$0xf]
        %v1290 = vld [vmem:[%s2 + $0x40] sm:$0xf]
        %v1291 = vld [vmem:[%s2 + $0x44] sm:$0xf]
        %v1292 = vld [vmem:[%s2 + $0x48] sm:$0xf]
        %v1293 = vld [vmem:[%s2 + $0x4c] sm:$0xf]
        %v1294 = vld [vmem:[%s2 + $0x50] sm:$0xf]
        %v1295 = vld [vmem:[%s2 + $0x54] sm:$0xf]
        %v1296 = vld [vmem:[%s2 + $0x58] sm:$0xf]
        %v1297 = vld [vmem:[%s2 + $0x5c] sm:$0xf]
        %v1298 = vld [vmem:[%s2 + $0x60] sm:$0xf]
        %v1299 = vld [vmem:[%s2 + $0x64] sm:$0xf]
        %v1300 = vld [vmem:[%s2 + $0x68] sm:$0xf]
        %v1301 = vld [vmem:[%s2 + $0x6c] sm:$0xf]
        %v1302 = vld [vmem:[%s2 + $0x70] sm:$0xf]
        %v1303 = vld [vmem:[%s2 + $0x74] sm:$0xf]
        %v1304 = vld [vmem:[%s2 + $0x78] sm:$0xf]
        %v1305 = vld [vmem:[%s2 + $0x7c] sm:$0xf]
        %v1306 = vld [vmem:[%s2 + $0x80] sm:$0xf]
        %v1307 = vld [vmem:[%s2 + $0x84] sm:$0xf]
        %v1308 = vld [vmem:[%s2 + $0x88] sm:$0xf]
        %v1309 = vld [vmem:[%s2 + $0x8c] sm:$0xf]
        %v1310 = vld [vmem:[%s2 + $0x90] sm:$0xf]
        %v1311 = vld [vmem:[%s2 + $0x94] sm:$0xf]
        %v1312 = vld [vmem:[%s2 + $0x98] sm:$0xf]
        %v1313 = vld [vmem:[%s2 + $0x9c] sm:$0xf]
        %v1314 = vld [vmem:[%s2 + $0xa0] sm:$0xf]
        %v1315 = vld [vmem:[%s2 + $0xa4] sm:$0xf]
        %v1316 = vld [vmem:[%s2 + $0xa8] sm:$0xf]
        %v1317 = vld [vmem:[%s2 + $0xac] sm:$0xf]
        %v1318 = vld [vmem:[%s2 + $0xb0] sm:$0xf]
        %v1319 = vld [vmem:[%s2 + $0xb4] sm:$0xf]
        %v1320 = vld [vmem:[%s2 + $0xb8] sm:$0xf]
        %v1321 = vld [vmem:[%s2 + $0xbc] sm:$0xf]
        %vm1322 = vsmask.f32 7424
        %v1323 = vshrl.u32 %v1269, 16
        %v1325 = vshll.u32 %v1269, 16
        %v1327 = vrot.slane %v1325, 1
        %v1328 = vor.u32 %v1323, %v1327
        %v1329 = vshll.u32 %v1272, 16
        %v1331 = vrot.slane %v1329, 1
        %v1332 = vsel %vm1322, %v1328, %v1331
        %v1333 = vshrl.u32 %v1272, 16
        %v1335 = vor.u32 %v1333, %v1331
        %v1354 = vunpack.c.l.b16 %v1290
        %v1355 = vunpack.c.l.b16 %v1291
        %v1356 = vunpack.c.l.b16 %v1292
        %v1357 = vunpack.c.l.b16 %v1293
        %v1358 = vunpack.c.l.b16 %v1294
        %v1359 = vunpack.c.l.b16 %v1295
        %v1360 = vunpack.c.l.b16 %v1296
        %v1361 = vunpack.c.l.b16 %v1297
        %v1362 = vunpack.c.l.b16 %v1298
        %v1363 = vunpack.c.l.b16 %v1299
        %v1364 = vunpack.c.l.b16 %v1300
        %v1365 = vunpack.c.l.b16 %v1301
        %v1366 = vunpack.c.l.b16 %v1302
        %v1367 = vunpack.c.l.b16 %v1303
        %v1368 = vunpack.c.l.b16 %v1304
        %v1369 = vunpack.c.l.b16 %v1305
        %v1370 = vpack.c.b16 %v1355, %v1354
        %v1371 = vpack.c.b16 %v1357, %v1356
        %v1372 = vpack.c.b16 %v1359, %v1358
        %v1373 = vpack.c.b16 %v1361, %v1360
        %v1374 = vpack.c.b16 %v1363, %v1362
        %v1375 = vpack.c.b16 %v1365, %v1364
        %v1376 = vpack.c.b16 %v1367, %v1366
        %v1377 = vpack.c.b16 %v1369, %v1368
        %1386 = vmatprep.subr.bf16.mxu0 0
        %1387 = vmatpush1.bf16.msra.mxu0 %v1370
        %1388 = vmatprep.subr.bf16.mxu0 0
        %1389 = vmatpush1.bf16.msra.mxu0 %v1371
        %1390 = vmatprep.subr.bf16.mxu0 0
        %1391 = vmatpush1.bf16.msra.mxu0 %v1372
        %1392 = vmatprep.subr.bf16.mxu0 0
        %1393 = vmatpush1.bf16.msra.mxu0 %v1373
        %1394 = vmatprep.subr.bf16.mxu0 0
        %1395 = vmatpush1.bf16.msra.mxu0 %v1374
        %1396 = vmatprep.subr.bf16.mxu0 0
        %1397 = vmatpush1.bf16.msra.mxu0 %v1375
        %1398 = vmatprep.subr.bf16.mxu0 0
        %1399 = vmatpush1.bf16.msra.mxu0 %v1376
        %1400 = vmatprep.subr.bf16.mxu0 0
        %1401 = vmatpush1.bf16.msra.mxu0 %v1377
        %1402 = vmatprep.subr.bf16.mxu0 0
        %1403 = vmatpush1.bf16.msra.mxu0 0
        %1404 = vmatprep.subr.bf16.mxu0 0
        %1405 = vmatpush1.bf16.msra.mxu0 0
        %1406 = vmatprep.subr.bf16.mxu0 0
        %1407 = vmatpush1.bf16.msra.mxu0 0
        %1408 = vmatprep.subr.bf16.mxu0 0
        %1409 = vmatpush1.bf16.msra.mxu0 0
        %1410 = vmatprep.subr.bf16.mxu0 0
        %1411 = vmatpush1.bf16.msra.mxu0 0
        %1412 = vmatprep.subr.bf16.mxu0 0
        %1413 = vmatpush1.bf16.msra.mxu0 0
        %1414 = vmatprep.subr.bf16.mxu0 0
        %1415 = vmatpush1.bf16.msra.mxu0 0
        %1416 = vmatprep.subr.bf16.mxu0 0
        %1417 = vmatpush1.bf16.msra.mxu0 0
        %1418 = vmatprep.mubr.bf16.mxu0 0
        %1419 = vmatmul.mubr.bf16.gmra.mrb[0].mxu0 %v1332
        %v1420 = vpop.f32.mrb[0].mxu0
        %v1421 = vadd.f32 0.0, %v1420
        %v1422 = vpop.f32.mrb[0].mxu0
        %v1423 = vpop.f32.mrb[0].mxu0
        %v1424 = vadd.f32 0.0, %v1423
        %v1425 = vpop.f32.mrb[0].mxu0
        %1426 = vmatprep.mubr.bf16.mxu0 0
        %1427 = vmatmul.mubr.bf16.gmra.mrb[0].mxu0 %v1335
        %v1428 = vpop.f32.mrb[0].mxu0
        %v1429 = vadd.f32 0.0, %v1428
        %v1430 = vpop.f32.mrb[0].mxu0
        %v1431 = vpop.f32.mrb[0].mxu0
        %v1432 = vadd.f32 0.0, %v1431
        %v1433 = vpop.f32.mrb[0].mxu0
        %1434 = vdwg.mxu0
        %v1451 = vunpack.c.l.b16 %v1274
        %v1452 = vunpack.c.l.b16 %v1275
        %v1453 = vunpack.c.l.b16 %v1276
        %v1454 = vunpack.c.l.b16 %v1277
        %v1455 = vunpack.c.l.b16 %v1278
        %v1456 = vunpack.c.l.b16 %v1279
        %v1457 = vunpack.c.l.b16 %v1280
        %v1458 = vunpack.c.l.b16 %v1281
        %v1459 = vunpack.c.l.b16 %v1282
        %v1460 = vunpack.c.l.b16 %v1283
        %v1461 = vunpack.c.l.b16 %v1284
        %v1462 = vunpack.c.l.b16 %v1285
        %v1463 = vunpack.c.l.b16 %v1286
        %v1464 = vunpack.c.l.b16 %v1287
        %v1465 = vunpack.c.l.b16 %v1288
        %v1466 = vunpack.c.l.b16 %v1289
        %v1467 = vpack.c.b16 %v1452, %v1451
        %v1468 = vpack.c.b16 %v1454, %v1453
        %v1469 = vpack.c.b16 %v1456, %v1455
        %v1470 = vpack.c.b16 %v1458, %v1457
        %v1471 = vpack.c.b16 %v1460, %v1459
        %v1472 = vpack.c.b16 %v1462, %v1461
        %v1473 = vpack.c.b16 %v1464, %v1463
        %v1474 = vpack.c.b16 %v1466, %v1465
        %1483 = vmatprep.subr.bf16.mxu0 0
        %1484 = vmatpush1.bf16.msra.mxu0 %v1467
        %1485 = vmatprep.subr.bf16.mxu0 0
        %1486 = vmatpush1.bf16.msra.mxu0 %v1468
        %1487 = vmatprep.subr.bf16.mxu0 0
        %1488 = vmatpush1.bf16.msra.mxu0 %v1469
        %1489 = vmatprep.subr.bf16.mxu0 0
        %1490 = vmatpush1.bf16.msra.mxu0 %v1470
        %1491 = vmatprep.subr.bf16.mxu0 0
        %1492 = vmatpush1.bf16.msra.mxu0 %v1471
        %1493 = vmatprep.subr.bf16.mxu0 0
        %1494 = vmatpush1.bf16.msra.mxu0 %v1472
        %1495 = vmatprep.subr.bf16.mxu0 0
        %1496 = vmatpush1.bf16.msra.mxu0 %v1473
        %1497 = vmatprep.subr.bf16.mxu0 0
        %1498 = vmatpush1.bf16.msra.mxu0 %v1474
        %1499 = vmatprep.subr.bf16.mxu0 0
        %1500 = vmatpush1.bf16.msra.mxu0 0
        %1501 = vmatprep.subr.bf16.mxu0 0
        %1502 = vmatpush1.bf16.msra.mxu0 0
        %1503 = vmatprep.subr.bf16.mxu0 0
        %1504 = vmatpush1.bf16.msra.mxu0 0
        %1505 = vmatprep.subr.bf16.mxu0 0
        %1506 = vmatpush1.bf16.msra.mxu0 0
        %1507 = vmatprep.subr.bf16.mxu0 0
        %1508 = vmatpush1.bf16.msra.mxu0 0
        %1509 = vmatprep.subr.bf16.mxu0 0
        %1510 = vmatpush1.bf16.msra.mxu0 0
        %1511 = vmatprep.subr.bf16.mxu0 0
        %1512 = vmatpush1.bf16.msra.mxu0 0
        %1513 = vmatprep.subr.bf16.mxu0 0
        %1514 = vmatpush1.bf16.msra.mxu0 0
        %1515 = vmatprep.mubr.bf16.mxu0 0
        %1516 = vmatmul.mubr.bf16.gmra.mrb[0].mxu0 %v1269
        %v1517 = vpop.f32.mrb[0].mxu0
        %v1518 = vadd.f32 %v1421, %v1517
        %v1519 = vpop.f32.mrb[0].mxu0
        %v1520 = vpop.f32.mrb[0].mxu0
        %v1521 = vadd.f32 %v1424, %v1520
        %v1522 = vpop.f32.mrb[0].mxu0
        %1523 = vmatprep.mubr.bf16.mxu0 0
        %1524 = vmatmul.mubr.bf16.gmra.mrb[0].mxu0 %v1272
        %v1525 = vpop.f32.mrb[0].mxu0
        %v1526 = vadd.f32 %v1429, %v1525
        %v1527 = vpop.f32.mrb[0].mxu0
        %v1528 = vpop.f32.mrb[0].mxu0
        %v1529 = vadd.f32 %v1432, %v1528
        %v1530 = vpop.f32.mrb[0].mxu0
        %1531 = vdwg.mxu0
        %vm1534 = vcmask 1046528
        %v1535 = vrot.slane %v1269, 1
        %v1536 = vrot.slane %v1272, 1
        %v1537 = vsel %vm1534, %v1535, %v1536
        %v1556 = vunpack.c.l.b16 %v1306
        %v1557 = vunpack.c.l.b16 %v1307
        %v1558 = vunpack.c.l.b16 %v1308
        %v1559 = vunpack.c.l.b16 %v1309
        %v1560 = vunpack.c.l.b16 %v1310
        %v1561 = vunpack.c.l.b16 %v1311
        %v1562 = vunpack.c.l.b16 %v1312
        %v1563 = vunpack.c.l.b16 %v1313
        %v1564 = vunpack.c.l.b16 %v1314
        %v1565 = vunpack.c.l.b16 %v1315
        %v1566 = vunpack.c.l.b16 %v1316
        %v1567 = vunpack.c.l.b16 %v1317
        %v1568 = vunpack.c.l.b16 %v1318
        %v1569 = vunpack.c.l.b16 %v1319
        %v1570 = vunpack.c.l.b16 %v1320
        %v1571 = vunpack.c.l.b16 %v1321
        %v1572 = vpack.c.b16 %v1557, %v1556
        %v1573 = vpack.c.b16 %v1559, %v1558
        %v1574 = vpack.c.b16 %v1561, %v1560
        %v1575 = vpack.c.b16 %v1563, %v1562
        %v1576 = vpack.c.b16 %v1565, %v1564
        %v1577 = vpack.c.b16 %v1567, %v1566
        %v1578 = vpack.c.b16 %v1569, %v1568
        %v1579 = vpack.c.b16 %v1571, %v1570
        %1588 = vmatprep.subr.bf16.mxu0 0
        %1589 = vmatpush1.bf16.msra.mxu0 %v1572
        %1590 = vmatprep.subr.bf16.mxu0 0
        %1591 = vmatpush1.bf16.msra.mxu0 %v1573
        %1592 = vmatprep.subr.bf16.mxu0 0
        %1593 = vmatpush1.bf16.msra.mxu0 %v1574
        %1594 = vmatprep.subr.bf16.mxu0 0
        %1595 = vmatpush1.bf16.msra.mxu0 %v1575
        %1596 = vmatprep.subr.bf16.mxu0 0
        %1597 = vmatpush1.bf16.msra.mxu0 %v1576
        %1598 = vmatprep.subr.bf16.mxu0 0
        %1599 = vmatpush1.bf16.msra.mxu0 %v1577
        %1600 = vmatprep.subr.bf16.mxu0 0
        %1601 = vmatpush1.bf16.msra.mxu0 %v1578
        %1602 = vmatprep.subr.bf16.mxu0 0
        %1603 = vmatpush1.bf16.msra.mxu0 %v1579
        %1604 = vmatprep.subr.bf16.mxu0 0
        %1605 = vmatpush1.bf16.msra.mxu0 0
        %1606 = vmatprep.subr.bf16.mxu0 0
        %1607 = vmatpush1.bf16.msra.mxu0 0
        %1608 = vmatprep.subr.bf16.mxu0 0
        %1609 = vmatpush1.bf16.msra.mxu0 0
        %1610 = vmatprep.subr.bf16.mxu0 0
        %1611 = vmatpush1.bf16.msra.mxu0 0
        %1612 = vmatprep.subr.bf16.mxu0 0
        %1613 = vmatpush1.bf16.msra.mxu0 0
        %1614 = vmatprep.subr.bf16.mxu0 0
        %1615 = vmatpush1.bf16.msra.mxu0 0
        %1616 = vmatprep.subr.bf16.mxu0 0
        %1617 = vmatpush1.bf16.msra.mxu0 0
        %1618 = vmatprep.subr.bf16.mxu0 0
        %1619 = vmatpush1.bf16.msra.mxu0 0
        %1620 = vmatprep.mubr.bf16.mxu0 0
        %1621 = vmatmul.mubr.bf16.gmra.mrb[0].mxu0 %v1537
        %v1622 = vpop.f32.mrb[0].mxu0
        %v1623 = vadd.f32 0.0, %v1622
        %v1624 = vpop.f32.mrb[0].mxu0
        %v1625 = vpop.f32.mrb[0].mxu0
        %v1626 = vadd.f32 0.0, %v1625
        %v1627 = vpop.f32.mrb[0].mxu0
        %1628 = vmatprep.mubr.bf16.mxu0 0
        %1629 = vmatmul.mubr.bf16.gmra.mrb[0].mxu0 %v1536
        %v1630 = vpop.f32.mrb[0].mxu0
        %v1631 = vadd.f32 0.0, %v1630
        %v1632 = vpop.f32.mrb[0].mxu0
        %v1633 = vpop.f32.mrb[0].mxu0
        %v1634 = vadd.f32 0.0, %v1633
        %v1635 = vpop.f32.mrb[0].mxu0
        %1636 = vdwg.mxu0
        %v1637 = vadd.f32 %v1518, %v1623
        %v1638 = vadd.f32 %v1521, %v1626
        %v1639 = vadd.f32 %v1526, %v1631
        %v1640 = vadd.f32 %v1529, %v1634
        %v1641 = vadd.f32 %v1637, %v1032
        %v1642 = vadd.f32 %v1638, %v1032
        %v1643 = vadd.f32 %v1639, %v1032
        %v1644 = vadd.f32 %v1640, %v1032
        %v1645 = vxor.u32 %v1641, 2147483648
        %v1646 = vxor.u32 %v1642, 2147483648
        %v1647 = vxor.u32 %v1643, 2147483648
        %v1648 = vxor.u32 %v1644, 2147483648
        %v1649 = vmul.f32 %v1645, 1.442695
        %v1650 = vpow.pop %v1649
        %v1651 = vmul.f32 %v1646, 1.442695
        %v1652 = vpow.pop %v1651
        %v1653 = vmul.f32 %v1647, 1.442695
        %v1654 = vpow.pop %v1653
        %v1655 = vmul.f32 %v1648, 1.442695
        %v1656 = vpow.pop %v1655
        %v1657 = vadd.f32 %v1650, 1.0
        %v1658 = vadd.f32 %v1652, 1.0
        %v1659 = vadd.f32 %v1654, 1.0
        %v1660 = vadd.f32 %v1656, 1.0
        %v1661 = vrcp.pop %v1657
        %v1662 = vmul.f32 1.0, %v1661
        %v1663 = vrcp.pop %v1658
        %v1664 = vmul.f32 1.0, %v1663
        %v1665 = vrcp.pop %v1659
        %v1666 = vmul.f32 1.0, %v1665
        %v1667 = vrcp.pop %v1660
        %v1668 = vmul.f32 1.0, %v1667
        %1673 = vrot.lane.b32.xlu0 %v1662, 96
        %v1674 = vpop.permute.xlu0 %1673
        %1675 = vrot.lane.b32.xlu0 %v1664, 96
        %v1676 = vpop.permute.xlu0 %1675
        %1677 = vrot.lane.b32.xlu0 %v1666, 96
        %v1678 = vpop.permute.xlu0 %1677
        %1679 = vrot.lane.b32.xlu0 %v1668, 96
        %v1680 = vpop.permute.xlu0 %1679
        %v1685 = vmul.f32 %v1641, %v1674
        %v1686 = vmul.f32 %v1642, %v1676
        %v1687 = vmul.f32 %v1643, %v1678
        %v1688 = vmul.f32 %v1644, %v1680
        %vm1689 = vcmask 1045504
        %v1690 = vsel %vm1689, %v1688, 0.0
        %1691 = vst.msk [vmem:[%s217] sm:$0xff] %vm1255, %v1685
        %1692 = vst.msk [vmem:[%s217 + $0x8] sm:$0xff] %vm1255, %v1686
        %1693 = vst.msk [vmem:[%s217 + $0x10] sm:$0xff] %vm1255, %v1687
        %1694 = vst.msk [vmem:[%s217 + $0x18] sm:$0xff] %vm1255, %v1690
        %s1695 = smul.u32 4, %s16
        %p1696 = scmp.lt.s32.totalorder %s1695, 7
        %s1697 = scalar_select %p1696, %s1695, 7
        %s1698 = smul.addr %s1697, 8
        %s1699 = scalar_lea.vmem %s4, %s1698
        // Predicated region
        $region41: #{tpu_custom_call.1} parent=35 // pred_check
          %p1700 = pneg %p123
        $region42: #{tpu_custom_call.1} parent=35 // pred_check_branch
          %1702 = sbr.rel (%p1700) target = $region44
        $region43: #{tpu_custom_call.1} parent=35 // pred_region
          %s1703 = smul.u32 4, %s16
        $region44: #{tpu_custom_call.1} parent=35 // pred_fallthru
          _
      $region36: #{tpu_custom_call.1} parent=5 // pred_fallthru
        _
      %p1704 = scmp.le.s32.totalorder 2, %s11
      // Predicated region
      $region45: #{tpu_custom_call.1} parent=5 // pred_check
        %p1705 = pneg %p1704
      $region46: #{tpu_custom_call.1} parent=5 // pred_check_branch
        %1707 = sbr.rel (%p1705) target = $region48
      $region47: #{tpu_custom_call.1} parent=5 // pred_region
        %s1708 = ssub.s32 %s11, 2
        // Predicated region
        $region49: #{tpu_custom_call.1} parent=47 // pred_check
          %p1709 = pneg %p129
        $region50: #{tpu_custom_call.1} parent=47 // pred_check_branch
          %1711 = sbr.rel (%p1709) target = $region52
        $region51: #{tpu_custom_call.1} parent=47 // pred_region
          %s1712 = smul.u32 4, %s17
          %p1713 = scmp.lt.s32.totalorder %s1712, 7
          %s1714 = scalar_select %p1713, %s1712, 7
          %s1715 = smul.addr %s1714, 8
          %s1716 = scalar_lea.vmem %s4, %s1715
        $region52: #{tpu_custom_call.1} parent=47 // pred_fallthru
          _
      $region48: #{tpu_custom_call.1} parent=5 // pred_fallthru
        _
    $region6: #{tpu_custom_call.1} parent=1 // loop_footer
      %s15 = sadd.s32 1, %s11
    $region7: #{tpu_custom_call.1} parent=1 // loop_footer_branch
      %10 = sbr.rel target = $region3
    $region8: #{tpu_custom_call.1} parent=1 // loop_exit
      _
    %1717 = vsyncpa [#allocation3], 1
    %s1718 = scalar_lea.sflag [#allocation3], 1
    %1719 = vsyncpa %s1718, 1

</llo_original>
